<compile_context>
chip_gen: v7x
topology: tpu7x:2x2x1
jax: 0.10.0
libtpu: 0.0.40
codegen_flags: <defaults>
</compile_context>

<pallas_src>
import jax
import jax.numpy as jnp
from jax.experimental import pallas as pl
from jax.experimental.pallas import tpu as pltpu


# ----------------------------------------------------------------------------
# Fused kernel: stem(1x1 conv) + ReLU + GAP + Linear + (Dropout=id) + Linear + Softmax
#   x_ref  : (B, Cin, HW)   channels on sublanes, pixels lane-dense
#   wt_ref : (Cfeat, Cin)   stem weight, transposed so wt[:, c] lane-broadcasts
#   bs_ref : (Cfeat, 1)     stem bias
#   w1_ref : (Cfeat, H1), b1_ref : (1, H1)
#   w2_ref : (H1, Cout),  b2_ref : (1, Cout)
#   o_ref  : (B, Cout)      categorical probabilities
# ----------------------------------------------------------------------------
def fused_model_kernel(x_ref, wt_ref, bs_ref, w1_ref, b1_ref, w2_ref, b2_ref, o_ref):
    x = x_ref[...]                    # (B, Cin, HW)
    wt = wt_ref[...]                  # (Cfeat, Cin)
    bs = bs_ref[...]                  # (Cfeat, 1)
    cin = x.shape[1]

    # 1x1-conv stem: y[b,f,p] = sum_c wt[f,c] * x[b,c,p], as Cin VPU broadcast-FMAs
    # (an MXU matmul with K=3 would waste ~98% of the systolic array).
    y = wt[:, 0:1][None, :, :] * x[:, 0:1, :]                    # (B, Cfeat, HW)
    for c in range(1, cin):                                      # static, Cin is tiny
        y = y + wt[:, c : c + 1][None, :, :] * x[:, c : c + 1, :]
    y = jnp.maximum(y + bs[None, :, :], 0.0)                     # bias + ReLU

    # Global average pool over pixels (lane-axis reduce) -> (B, Cfeat)
    feat = jnp.mean(y, axis=2)

    # fc head, batched over B: Linear(Cfeat -> H1) on the MXU.
    h = jnp.dot(feat, w1_ref[...],
                preferred_element_type=jnp.float32) + b1_ref[...]       # (B, H1)

    # Dropout(p=0.4): identity at inference time.
    logits = jnp.dot(h, w2_ref[...],
                     preferred_element_type=jnp.float32) + b2_ref[...]  # (B, Cout)

    # Numerically stable softmax(dim=1); divide via EUP approximate reciprocal.
    m = jnp.max(logits, axis=1, keepdims=True)
    e = jnp.exp(logits - m)
    denom = jnp.sum(e, axis=1, keepdims=True)
    o_ref[...] = e * pl.reciprocal(denom, approx=True)


# ----------------------------------------------------------------------------
# Wrapper
# ----------------------------------------------------------------------------
def model_out_forward(x_nchw, params):
    """x_nchw: (B, Cin, H, W) float32 — PyTorch layout. Returns (B, out_classes)."""
    wt, bs, w1, b1, w2, b2 = params
    B, Cin, H, W = x_nchw.shape
    HW = H * W
    Cout = w2.shape[1]

    # Free contiguous reshape (no transpose): (B, Cin, H, W) -> (B, Cin, HW)
    x = x_nchw.reshape(B, Cin, HW)

    vmem = pl.BlockSpec(memory_space=pltpu.MemorySpace.VMEM)     # whole array, VMEM-resident
    return pl.pallas_call(
        fused_model_kernel,
        out_shape=jax.ShapeDtypeStruct((B, Cout), jnp.float32),
        in_specs=[vmem] * 7,
        out_specs=vmem,
        compiler_params=pltpu.CompilerParams(
            vmem_limit_bytes=32 * 1024 * 1024,
        ),
    )(x, wt, bs, w1, b1, w2, b2)


def reference_forward(x_nchw, params):
    """Pure-JAX reference of the same math (for correctness check)."""
    wt, bs, w1, b1, w2, b2 = params
    B, Cin, H, W = x_nchw.shape
    x = x_nchw.reshape(B, Cin, H * W)
    y = jnp.einsum("fc,bcp->bfp", wt, x) + bs[None, :, :]
    y = jnp.maximum(y, 0.0)
    feat = jnp.mean(y, axis=2)                    # (B, Cfeat)
    h = feat @ w1 + b1                            # Dropout = identity (eval)
    logits = h @ w2 + b2
    return jax.nn.softmax(logits, axis=1)


def init_params(key, cin, cfeat, hidden, cout):
    """Deterministic, PyTorch-style uniform(-1/sqrt(fan_in), 1/sqrt(fan_in)) init."""
    ks = jax.random.split(key, 6)

    def unif(k, shape, fan_in):
        bound = 1.0 / jnp.sqrt(jnp.float32(fan_in))
        return jax.random.uniform(k, shape, jnp.float32, -bound, bound)

    wt = unif(ks[0], (cfeat, cin), cin)          # stem weight (already transposed)
    bs = unif(ks[1], (cfeat, 1), cin)            # stem bias
    w1 = unif(ks[2], (cfeat, hidden), cfeat)     # Linear(in_features, 1024)  (scaled)
    b1 = unif(ks[3], (1, hidden), cfeat)
    w2 = unif(ks[4], (hidden, cout), hidden)     # Linear(1024, output_classes)
    b2 = unif(ks[5], (1, cout), hidden)
    return (wt, bs, w1, b1, w2, b2)


if __name__ == "__main__":
    # Small shapes consistent with the module's forward:
    #   image input (B, 3, H, W); in_features 2048 -> 256, hidden 1024 -> 128, classes = 3.
    B, Cin, H, W = 2, 3, 16, 16
    Cfeat, Hidden, OutClasses = 256, 128, 3

    key = jax.random.PRNGKey(0)
    k_x, k_p = jax.random.split(key)
    x = jax.random.normal(k_x, (B, Cin, H, W), jnp.float32)
    params = init_params(k_p, Cin, Cfeat, Hidden, OutClasses)

    out = jax.jit(model_out_forward)(x, params)
    out = jax.block_until_ready(out)
    ref = reference_forward(x, params)

    assert out.shape == (B, OutClasses)
    assert bool(jnp.all(jnp.isfinite(out)))
    # softmax(dim=1) rows sum to 1 (approx reciprocal -> loose tolerance)
    assert bool(jnp.allclose(jnp.sum(out, axis=1), 1.0, atol=2e-3))
    assert bool(jnp.allclose(out, ref, rtol=5e-3, atol=5e-3))

    print("KERNEL_OK")
</pallas_src>

<mosaic_0001>
module attributes {stable_mosaic.version = 11 : i64} {
  func.func @fused_model_kernel(%arg0: memref<2x3x256xf32, #tpu.memory_space<vmem>>, %arg1: memref<256x3xf32, #tpu.memory_space<vmem>>, %arg2: memref<256x1xf32, #tpu.memory_space<vmem>>, %arg3: memref<256x128xf32, #tpu.memory_space<vmem>>, %arg4: memref<1x128xf32, #tpu.memory_space<vmem>>, %arg5: memref<128x3xf32, #tpu.memory_space<vmem>>, %arg6: memref<1x3xf32, #tpu.memory_space<vmem>>, %arg7: memref<2x3xf32, #tpu.memory_space<vmem>>) attributes {dimension_semantics = [], scalar_prefetch = 0 : i64, scratch_operands = 0 : i64, tpu.core_type = #tpu.core_type<tc>} {
    %c0 = arith.constant 0 : index
    %c0_0 = arith.constant 0 : index
    %c0_1 = arith.constant 0 : index
    %0 = vector.load %arg0[%c0, %c0_0, %c0_1] : memref<2x3x256xf32, #tpu.memory_space<vmem>>, vector<2x3x256xf32>
    %c0_2 = arith.constant 0 : index
    %c0_3 = arith.constant 0 : index
    %1 = vector.load %arg1[%c0_2, %c0_3] : memref<256x3xf32, #tpu.memory_space<vmem>>, vector<256x3xf32>
    %c0_4 = arith.constant 0 : index
    %c0_5 = arith.constant 0 : index
    %2 = vector.load %arg2[%c0_4, %c0_5] : memref<256x1xf32, #tpu.memory_space<vmem>>, vector<256x1xf32>
    %3 = vector.extract_strided_slice %1 {offsets = [0, 0], sizes = [256, 1], strides = [1, 1]} : vector<256x3xf32> to vector<256x1xf32>
    %4 = vector.shape_cast %3 : vector<256x1xf32> to vector<1x256x1xf32>
    %5 = vector.extract_strided_slice %0 {offsets = [0, 0, 0], sizes = [2, 1, 256], strides = [1, 1, 1]} : vector<2x3x256xf32> to vector<2x1x256xf32>
    %6 = vector.broadcast %4 : vector<1x256x1xf32> to vector<2x256x256xf32>
    %7 = vector.broadcast %5 : vector<2x1x256xf32> to vector<2x256x256xf32>
    %8 = arith.mulf %6, %7 : vector<2x256x256xf32>
    %9 = vector.extract_strided_slice %1 {offsets = [0, 1], sizes = [256, 1], strides = [1, 1]} : vector<256x3xf32> to vector<256x1xf32>
    %10 = vector.shape_cast %9 : vector<256x1xf32> to vector<1x256x1xf32>
    %11 = vector.extract_strided_slice %0 {offsets = [0, 1, 0], sizes = [2, 1, 256], strides = [1, 1, 1]} : vector<2x3x256xf32> to vector<2x1x256xf32>
    %12 = vector.broadcast %10 : vector<1x256x1xf32> to vector<2x256x256xf32>
    %13 = vector.broadcast %11 : vector<2x1x256xf32> to vector<2x256x256xf32>
    %14 = arith.mulf %12, %13 : vector<2x256x256xf32>
    %15 = arith.addf %8, %14 : vector<2x256x256xf32>
    %16 = vector.extract_strided_slice %1 {offsets = [0, 2], sizes = [256, 1], strides = [1, 1]} : vector<256x3xf32> to vector<256x1xf32>
    %17 = vector.shape_cast %16 : vector<256x1xf32> to vector<1x256x1xf32>
    %18 = vector.extract_strided_slice %0 {offsets = [0, 2, 0], sizes = [2, 1, 256], strides = [1, 1, 1]} : vector<2x3x256xf32> to vector<2x1x256xf32>
    %19 = vector.broadcast %17 : vector<1x256x1xf32> to vector<2x256x256xf32>
    %20 = vector.broadcast %18 : vector<2x1x256xf32> to vector<2x256x256xf32>
    %21 = arith.mulf %19, %20 : vector<2x256x256xf32>
    %22 = arith.addf %15, %21 : vector<2x256x256xf32>
    %23 = vector.shape_cast %2 : vector<256x1xf32> to vector<1x256x1xf32>
    %24 = vector.broadcast %23 : vector<1x256x1xf32> to vector<2x256x256xf32>
    %25 = arith.addf %22, %24 : vector<2x256x256xf32>
    %cst = arith.constant 0.000000e+00 : f32
    %26 = vector.broadcast %cst : f32 to vector<2x256x256xf32>
    %27 = arith.maximumf %25, %26 : vector<2x256x256xf32>
    %cst_6 = arith.constant dense<0.000000e+00> : vector<2x256xf32>
    %28 = vector.multi_reduction <add>, %27, %cst_6 [2] : vector<2x256x256xf32> to vector<2x256xf32>
    %cst_7 = arith.constant 2.560000e+02 : f32
    %29 = vector.broadcast %cst_7 : f32 to vector<2x256xf32>
    %30 = arith.divf %28, %29 : vector<2x256xf32>
    %c0_8 = arith.constant 0 : index
    %c0_9 = arith.constant 0 : index
    %31 = vector.load %arg3[%c0_8, %c0_9] : memref<256x128xf32, #tpu.memory_space<vmem>>, vector<256x128xf32>
    %cst_10 = arith.constant dense<0.000000e+00> : vector<2x128xf32>
    %32 = tpu.matmul %30, %31, %cst_10 {dimension_numbers = #tpu.dot_dimension_numbers<[1], [0], [0], [1], [0, 0, 1, 1], [], []>} : vector<2x256xf32>, vector<256x128xf32>, vector<2x128xf32> -> vector<2x128xf32>
    %c0_11 = arith.constant 0 : index
    %c0_12 = arith.constant 0 : index
    %33 = vector.load %arg4[%c0_11, %c0_12] : memref<1x128xf32, #tpu.memory_space<vmem>>, vector<1x128xf32>
    %34 = vector.broadcast %33 : vector<1x128xf32> to vector<2x128xf32>
    %35 = arith.addf %32, %34 : vector<2x128xf32>
    %c0_13 = arith.constant 0 : index
    %c0_14 = arith.constant 0 : index
    %36 = vector.load %arg5[%c0_13, %c0_14] : memref<128x3xf32, #tpu.memory_space<vmem>>, vector<128x3xf32>
    %cst_15 = arith.constant dense<0.000000e+00> : vector<2x3xf32>
    %37 = tpu.matmul %35, %36, %cst_15 {dimension_numbers = #tpu.dot_dimension_numbers<[1], [0], [0], [1], [0, 0, 1, 1], [], []>} : vector<2x128xf32>, vector<128x3xf32>, vector<2x3xf32> -> vector<2x3xf32>
    %c0_16 = arith.constant 0 : index
    %c0_17 = arith.constant 0 : index
    %38 = vector.load %arg6[%c0_16, %c0_17] : memref<1x3xf32, #tpu.memory_space<vmem>>, vector<1x3xf32>
    %39 = vector.broadcast %38 : vector<1x3xf32> to vector<2x3xf32>
    %40 = arith.addf %37, %39 : vector<2x3xf32>
    %cst_18 = arith.constant dense<0xFF800000> : vector<2xf32>
    %41 = vector.multi_reduction <maximumf>, %40, %cst_18 [1] : vector<2x3xf32> to vector<2xf32>
    %42 = vector.shape_cast %41 : vector<2xf32> to vector<2x1xf32>
    %43 = vector.broadcast %42 : vector<2x1xf32> to vector<2x3xf32>
    %44 = arith.subf %40, %43 : vector<2x3xf32>
    %45 = math.exp %44 : vector<2x3xf32>
    %cst_19 = arith.constant dense<0.000000e+00> : vector<2xf32>
    %46 = vector.multi_reduction <add>, %45, %cst_19 [1] : vector<2x3xf32> to vector<2xf32>
    %47 = vector.shape_cast %46 : vector<2xf32> to vector<2x1xf32>
    %48 = tpu.reciprocal %47 {approx = true} : vector<2x1xf32> -> vector<2x1xf32>
    %49 = vector.broadcast %48 : vector<2x1xf32> to vector<2x3xf32>
    %50 = arith.mulf %45, %49 : vector<2x3xf32>
    %c0_20 = arith.constant 0 : index
    %c0_21 = arith.constant 0 : index
    %51 = vector.load %arg7[%c0_20, %c0_21] : memref<2x3xf32, #tpu.memory_space<vmem>>, vector<2x3xf32>
    tpu.vector_store %arg7[%c0_20, %c0_21], %50 {strides = array<i32>} : memref<2x3xf32, #tpu.memory_space<vmem>>, vector<2x3xf32>,
    return
  }
}

</mosaic_0001>

<llo_original>
// kernel: model_out_forward.1
$region0: #{model_out_forward.1}
  #allocation0 [shape = 'u32[]', space=smem, size = 0x4, offset = 0x4, fixed_abs, tag = 'smem constant byte address 0x4 - core index']
  #allocation1 [shape = 'u32[144,128]{1,0:T(1,128)}', space=vmem, size = 0x12000, scoped, tag = 'internal scratch']
  %s0 = inlined_call_operand.vmem [shape: f32[2,3,256], index: 0, kind: input, shape index: {}]
  %s1 = inlined_call_operand.vmem [shape: f32[256,3], index: 1, kind: input, shape index: {}]
  %s2 = inlined_call_operand.vmem [shape: f32[256,1], index: 2, kind: input, shape index: {}]
  %s3 = inlined_call_operand.vmem [shape: f32[256,128], index: 3, kind: input, shape index: {}]
  %s4 = inlined_call_operand.vmem [shape: f32[1,128], index: 4, kind: input, shape index: {}]
  %s5 = inlined_call_operand.vmem [shape: f32[128,3], index: 5, kind: input, shape index: {}]
  %s6 = inlined_call_operand.vmem [shape: f32[1,3], index: 6, kind: input, shape index: {}]
  %s7 = inlined_call_operand.hbm [shape: f32[2,3], index: 7, kind: output, shape index: {}]
  %s8 = sld [smem:[#allocation0]]
  $region38: #{model_out_forward.1} parent=0
    _
  %s10 = ssub.s32 1, %s8
  %s11 = scalar_select 0, %s10, %s8
  $region1: #{model_out_forward.1} parent=0
    #allocation2 [shape = 'u8[1024]{0}', space=vmem, size = 0x400, scoped, tag = 'output window, operand 0, single buffered']
    #allocation3 [shape = 's32[1]{0}', space=sflag, size = 0x4, scoped, tag = 'scoped memory for model_out_forward.1']
    %12 = vsyncpa [#allocation3], 0
    // Predicated region
    $region2: #{model_out_forward.1} parent=1 // pred_check
      _
    $region3: #{model_out_forward.1} parent=1 // pred_check_branch
      %14 = sbr.rel (0) target = $region5
    $region4: #{model_out_forward.1} parent=1 // pred_region
      _
    $region5: #{model_out_forward.1} parent=1 // pred_fallthru
      _
    // Predicated region
    $region6: #{model_out_forward.1} parent=1 // pred_check
      _
    $region7: #{model_out_forward.1} parent=1 // pred_check_branch
      %16 = sbr.rel (0) target = $region9
    $region8: #{model_out_forward.1} parent=1 // pred_region
      _
    $region9: #{model_out_forward.1} parent=1 // pred_fallthru
      _
    // Predicated region
    $region10: #{model_out_forward.1} parent=1 // pred_check
      _
    $region11: #{model_out_forward.1} parent=1 // pred_check_branch
      %18 = sbr.rel (0) target = $region13
    $region12: #{model_out_forward.1} parent=1 // pred_region
      _
    $region13: #{model_out_forward.1} parent=1 // pred_fallthru
      _
    // Predicated region
    $region14: #{model_out_forward.1} parent=1 // pred_check
      _
    $region15: #{model_out_forward.1} parent=1 // pred_check_branch
      %20 = sbr.rel (0) target = $region17
    $region16: #{model_out_forward.1} parent=1 // pred_region
      _
    $region17: #{model_out_forward.1} parent=1 // pred_fallthru
      _
    // Predicated region
    $region18: #{model_out_forward.1} parent=1 // pred_check
      _
    $region19: #{model_out_forward.1} parent=1 // pred_check_branch
      %22 = sbr.rel (0) target = $region21
    $region20: #{model_out_forward.1} parent=1 // pred_region
      _
    $region21: #{model_out_forward.1} parent=1 // pred_fallthru
      _
    // Predicated region
    $region22: #{model_out_forward.1} parent=1 // pred_check
      _
    $region23: #{model_out_forward.1} parent=1 // pred_check_branch
      %24 = sbr.rel (0) target = $region25
    $region24: #{model_out_forward.1} parent=1 // pred_region
      _
    $region25: #{model_out_forward.1} parent=1 // pred_fallthru
      _
    // Predicated region
    $region26: #{model_out_forward.1} parent=1 // pred_check
      _
    $region27: #{model_out_forward.1} parent=1 // pred_check_branch
      %26 = sbr.rel (0) target = $region29
    $region28: #{model_out_forward.1} parent=1 // pred_region
      _
    $region29: #{model_out_forward.1} parent=1 // pred_fallthru
      _
    %v27 = vld [vmem:[%s0] sm:$0x77]
    %v28 = vld [vmem:[%s0 + $0x8] sm:$0x77]
    %v29 = vld [vmem:[%s1] sm:$0xff]
    %v30 = vld [vmem:[%s1 + $0x8] sm:$0xff]
    %v31 = vld [vmem:[%s1 + $0x10] sm:$0xff]
    %v32 = vld [vmem:[%s1 + $0x18] sm:$0xff]
    %v33 = vld [vmem:[%s1 + $0x20] sm:$0xff]
    %v34 = vld [vmem:[%s1 + $0x28] sm:$0xff]
    %v35 = vld [vmem:[%s1 + $0x30] sm:$0xff]
    %v36 = vld [vmem:[%s1 + $0x38] sm:$0xff]
    %v37 = vld [vmem:[%s1 + $0x40] sm:$0xff]
    %v38 = vld [vmem:[%s1 + $0x48] sm:$0xff]
    %v39 = vld [vmem:[%s1 + $0x50] sm:$0xff]
    %v40 = vld [vmem:[%s1 + $0x58] sm:$0xff]
    %v41 = vld [vmem:[%s1 + $0x60] sm:$0xff]
    %v42 = vld [vmem:[%s1 + $0x68] sm:$0xff]
    %v43 = vld [vmem:[%s1 + $0x70] sm:$0xff]
    %v44 = vld [vmem:[%s1 + $0x78] sm:$0xff]
    %v45 = vld [vmem:[%s1 + $0x80] sm:$0xff]
    %v46 = vld [vmem:[%s1 + $0x88] sm:$0xff]
    %v47 = vld [vmem:[%s1 + $0x90] sm:$0xff]
    %v48 = vld [vmem:[%s1 + $0x98] sm:$0xff]
    %v49 = vld [vmem:[%s1 + $0xa0] sm:$0xff]
    %v50 = vld [vmem:[%s1 + $0xa8] sm:$0xff]
    %v51 = vld [vmem:[%s1 + $0xb0] sm:$0xff]
    %v52 = vld [vmem:[%s1 + $0xb8] sm:$0xff]
    %v53 = vld [vmem:[%s1 + $0xc0] sm:$0xff]
    %v54 = vld [vmem:[%s1 + $0xc8] sm:$0xff]
    %v55 = vld [vmem:[%s1 + $0xd0] sm:$0xff]
    %v56 = vld [vmem:[%s1 + $0xd8] sm:$0xff]
    %v57 = vld [vmem:[%s1 + $0xe0] sm:$0xff]
    %v58 = vld [vmem:[%s1 + $0xe8] sm:$0xff]
    %v59 = vld [vmem:[%s1 + $0xf0] sm:$0xff]
    %v60 = vld [vmem:[%s1 + $0xf8] sm:$0xff]
    %v61 = vld [vmem:[%s2] sm:$0xff]
    %v62 = vld [vmem:[%s2 + $0x8] sm:$0xff]
    %v63 = vld [vmem:[%s2 + $0x10] sm:$0xff]
    %v64 = vld [vmem:[%s2 + $0x18] sm:$0xff]
    %v65 = vld [vmem:[%s2 + $0x20] sm:$0xff]
    %v66 = vld [vmem:[%s2 + $0x28] sm:$0xff]
    %v67 = vld [vmem:[%s2 + $0x30] sm:$0xff]
    %v68 = vld [vmem:[%s2 + $0x38] sm:$0xff]
    %v69 = vld [vmem:[%s2 + $0x40] sm:$0xff]
    %v70 = vld [vmem:[%s2 + $0x48] sm:$0xff]
    %v71 = vld [vmem:[%s2 + $0x50] sm:$0xff]
    %v72 = vld [vmem:[%s2 + $0x58] sm:$0xff]
    %v73 = vld [vmem:[%s2 + $0x60] sm:$0xff]
    %v74 = vld [vmem:[%s2 + $0x68] sm:$0xff]
    %v75 = vld [vmem:[%s2 + $0x70] sm:$0xff]
    %v76 = vld [vmem:[%s2 + $0x78] sm:$0xff]
    %v77 = vld [vmem:[%s2 + $0x80] sm:$0xff]
    %v78 = vld [vmem:[%s2 + $0x88] sm:$0xff]
    %v79 = vld [vmem:[%s2 + $0x90] sm:$0xff]
    %v80 = vld [vmem:[%s2 + $0x98] sm:$0xff]
    %v81 = vld [vmem:[%s2 + $0xa0] sm:$0xff]
    %v82 = vld [vmem:[%s2 + $0xa8] sm:$0xff]
    %v83 = vld [vmem:[%s2 + $0xb0] sm:$0xff]
    %v84 = vld [vmem:[%s2 + $0xb8] sm:$0xff]
    %v85 = vld [vmem:[%s2 + $0xc0] sm:$0xff]
    %v86 = vld [vmem:[%s2 + $0xc8] sm:$0xff]
    %v87 = vld [vmem:[%s2 + $0xd0] sm:$0xff]
    %v88 = vld [vmem:[%s2 + $0xd8] sm:$0xff]
    %v89 = vld [vmem:[%s2 + $0xe0] sm:$0xff]
    %v90 = vld [vmem:[%s2 + $0xe8] sm:$0xff]
    %v91 = vld [vmem:[%s2 + $0xf0] sm:$0xff]
    %v92 = vld [vmem:[%s2 + $0xf8] sm:$0xff]
    %94 = vset.pattern.permute.xlu0 0
    %95 = vperm.xlu0 %94, %v29
    %v96 = vpop.permute.xlu0 %95
    %99 = vset.pattern.permute.xlu0 0
    %100 = vperm.xlu0 %99, %v30
    %v101 = vpop.permute.xlu0 %100
    %104 = vset.pattern.permute.xlu0 0
    %105 = vperm.xlu0 %104, %v31
    %v106 = vpop.permute.xlu0 %105
    %109 = vset.pattern.permute.xlu0 0
    %110 = vperm.xlu0 %109, %v32
    %v111 = vpop.permute.xlu0 %110
    %114 = vset.pattern.permute.xlu0 0
    %115 = vperm.xlu0 %114, %v33
    %v116 = vpop.permute.xlu0 %115
    %119 = vset.pattern.permute.xlu0 0
    %120 = vperm.xlu0 %119, %v34
    %v121 = vpop.permute.xlu0 %120
    %124 = vset.pattern.permute.xlu0 0
    %125 = vperm.xlu0 %124, %v35
    %v126 = vpop.permute.xlu0 %125
    %129 = vset.pattern.permute.xlu0 0
    %130 = vperm.xlu0 %129, %v36
    %v131 = vpop.permute.xlu0 %130
    %134 = vset.pattern.permute.xlu0 0
    %135 = vperm.xlu0 %134, %v37
    %v136 = vpop.permute.xlu0 %135
    %139 = vset.pattern.permute.xlu0 0
    %140 = vperm.xlu0 %139, %v38
    %v141 = vpop.permute.xlu0 %140
    %144 = vset.pattern.permute.xlu0 0
    %145 = vperm.xlu0 %144, %v39
    %v146 = vpop.permute.xlu0 %145
    %149 = vset.pattern.permute.xlu0 0
    %150 = vperm.xlu0 %149, %v40
    %v151 = vpop.permute.xlu0 %150
    %154 = vset.pattern.permute.xlu0 0
    %155 = vperm.xlu0 %154, %v41
    %v156 = vpop.permute.xlu0 %155
    %159 = vset.pattern.permute.xlu0 0
    %160 = vperm.xlu0 %159, %v42
    %v161 = vpop.permute.xlu0 %160
    %164 = vset.pattern.permute.xlu0 0
    %165 = vperm.xlu0 %164, %v43
    %v166 = vpop.permute.xlu0 %165
    %169 = vset.pattern.permute.xlu0 0
    %170 = vperm.xlu0 %169, %v44
    %v171 = vpop.permute.xlu0 %170
    %174 = vset.pattern.permute.xlu0 0
    %175 = vperm.xlu0 %174, %v45
    %v176 = vpop.permute.xlu0 %175
    %179 = vset.pattern.permute.xlu0 0
    %180 = vperm.xlu0 %179, %v46
    %v181 = vpop.permute.xlu0 %180
    %184 = vset.pattern.permute.xlu0 0
    %185 = vperm.xlu0 %184, %v47
    %v186 = vpop.permute.xlu0 %185
    %189 = vset.pattern.permute.xlu0 0
    %190 = vperm.xlu0 %189, %v48
    %v191 = vpop.permute.xlu0 %190
    %194 = vset.pattern.permute.xlu0 0
    %195 = vperm.xlu0 %194, %v49
    %v196 = vpop.permute.xlu0 %195
    %199 = vset.pattern.permute.xlu0 0
    %200 = vperm.xlu0 %199, %v50
    %v201 = vpop.permute.xlu0 %200
    %204 = vset.pattern.permute.xlu0 0
    %205 = vperm.xlu0 %204, %v51
    %v206 = vpop.permute.xlu0 %205
    %209 = vset.pattern.permute.xlu0 0
    %210 = vperm.xlu0 %209, %v52
    %v211 = vpop.permute.xlu0 %210
    %214 = vset.pattern.permute.xlu0 0
    %215 = vperm.xlu0 %214, %v53
    %v216 = vpop.permute.xlu0 %215
    %219 = vset.pattern.permute.xlu0 0
    %220 = vperm.xlu0 %219, %v54
    %v221 = vpop.permute.xlu0 %220
    %224 = vset.pattern.permute.xlu0 0
    %225 = vperm.xlu0 %224, %v55
    %v226 = vpop.permute.xlu0 %225
    %229 = vset.pattern.permute.xlu0 0
    %230 = vperm.xlu0 %229, %v56
    %v231 = vpop.permute.xlu0 %230
    %234 = vset.pattern.permute.xlu0 0
    %235 = vperm.xlu0 %234, %v57
    %v236 = vpop.permute.xlu0 %235
    %239 = vset.pattern.permute.xlu0 0
    %240 = vperm.xlu0 %239, %v58
    %v241 = vpop.permute.xlu0 %240
    %244 = vset.pattern.permute.xlu0 0
    %245 = vperm.xlu0 %244, %v59
    %v246 = vpop.permute.xlu0 %245
    %249 = vset.pattern.permute.xlu0 0
    %250 = vperm.xlu0 %249, %v60
    %v251 = vpop.permute.xlu0 %250
    %v255 = vlaneseq
    %v256 = vshrl.u32 %v255, 7
    %v257 = vsub.s32 0, %v256
    %v258 = vrot.slane %v27, %v257
    %v259 = vlaneseq
    %v260 = vshrl.u32 %v259, 7
    %v261 = vsub.s32 4, %v260
    %v262 = vrot.slane %v27, %v261
    %v263 = vlaneseq
    %v264 = vshrl.u32 %v263, 7
    %v265 = vsub.s32 0, %v264
    %v266 = vrot.slane %v28, %v265
    %v267 = vlaneseq
    %v268 = vshrl.u32 %v267, 7
    %v269 = vsub.s32 4, %v268
    %v270 = vrot.slane %v28, %v269
    %v275 = vlaneseq
    %v276 = vshrl.u32 %v275, 7
    %v277 = vsub.s32 0, %v276
    %v278 = vrot.slane %v258, %v277
    %v279 = vlaneseq
    %v280 = vshrl.u32 %v279, 7
    %v281 = vsub.s32 0, %v280
    %v282 = vrot.slane %v262, %v281
    %v283 = vlaneseq
    %v284 = vshrl.u32 %v283, 7
    %v285 = vsub.s32 0, %v284
    %v286 = vrot.slane %v266, %v285
    %v287 = vlaneseq
    %v288 = vshrl.u32 %v287, 7
    %v289 = vsub.s32 0, %v288
    %v290 = vrot.slane %v270, %v289
    %v291 = vmul.f32 %v96, %v278
    %v292 = vmul.f32 %v96, %v282
    %v293 = vmul.f32 %v101, %v278
    %v294 = vmul.f32 %v101, %v282
    %v295 = vmul.f32 %v106, %v278
    %v296 = vmul.f32 %v106, %v282
    %v297 = vmul.f32 %v111, %v278
    %v298 = vmul.f32 %v111, %v282
    %v299 = vmul.f32 %v116, %v278
    %v300 = vmul.f32 %v116, %v282
    %v301 = vmul.f32 %v121, %v278
    %v302 = vmul.f32 %v121, %v282
    %v303 = vmul.f32 %v126, %v278
    %v304 = vmul.f32 %v126, %v282
    %v305 = vmul.f32 %v131, %v278
    %v306 = vmul.f32 %v131, %v282
    %v307 = vmul.f32 %v136, %v278
    %v308 = vmul.f32 %v136, %v282
    %v309 = vmul.f32 %v141, %v278
    %v310 = vmul.f32 %v141, %v282
    %v311 = vmul.f32 %v146, %v278
    %v312 = vmul.f32 %v146, %v282
    %v313 = vmul.f32 %v151, %v278
    %v314 = vmul.f32 %v151, %v282
    %v315 = vmul.f32 %v156, %v278
    %v316 = vmul.f32 %v156, %v282
    %v317 = vmul.f32 %v161, %v278
    %v318 = vmul.f32 %v161, %v282
    %v319 = vmul.f32 %v166, %v278
    %v320 = vmul.f32 %v166, %v282
    %v321 = vmul.f32 %v171, %v278
    %v322 = vmul.f32 %v171, %v282
    %v323 = vmul.f32 %v176, %v278
    %v324 = vmul.f32 %v176, %v282
    %v325 = vmul.f32 %v181, %v278
    %v326 = vmul.f32 %v181, %v282
    %v327 = vmul.f32 %v186, %v278
    %v328 = vmul.f32 %v186, %v282
    %v329 = vmul.f32 %v191, %v278
    %v330 = vmul.f32 %v191, %v282
    %v331 = vmul.f32 %v196, %v278
    %v332 = vmul.f32 %v196, %v282
    %v333 = vmul.f32 %v201, %v278
    %v334 = vmul.f32 %v201, %v282
    %v335 = vmul.f32 %v206, %v278
    %v336 = vmul.f32 %v206, %v282
    %v337 = vmul.f32 %v211, %v278
    %v338 = vmul.f32 %v211, %v282
    %v339 = vmul.f32 %v216, %v278
    %v340 = vmul.f32 %v216, %v282
    %v341 = vmul.f32 %v221, %v278
    %v342 = vmul.f32 %v221, %v282
    %v343 = vmul.f32 %v226, %v278
    %v344 = vmul.f32 %v226, %v282
    %v345 = vmul.f32 %v231, %v278
    %v346 = vmul.f32 %v231, %v282
    %v347 = vmul.f32 %v236, %v278
    %v348 = vmul.f32 %v236, %v282
    %v349 = vmul.f32 %v241, %v278
    %v350 = vmul.f32 %v241, %v282
    %v351 = vmul.f32 %v246, %v278
    %v352 = vmul.f32 %v246, %v282
    %v353 = vmul.f32 %v251, %v278
    %v354 = vmul.f32 %v251, %v282
    %v355 = vmul.f32 %v96, %v286
    %v356 = vmul.f32 %v96, %v290
    %v357 = vmul.f32 %v101, %v286
    %v358 = vmul.f32 %v101, %v290
    %v359 = vmul.f32 %v106, %v286
    %v360 = vmul.f32 %v106, %v290
    %v361 = vmul.f32 %v111, %v286
    %v362 = vmul.f32 %v111, %v290
    %v363 = vmul.f32 %v116, %v286
    %v364 = vmul.f32 %v116, %v290
    %v365 = vmul.f32 %v121, %v286
    %v366 = vmul.f32 %v121, %v290
    %v367 = vmul.f32 %v126, %v286
    %v368 = vmul.f32 %v126, %v290
    %v369 = vmul.f32 %v131, %v286
    %v370 = vmul.f32 %v131, %v290
    %v371 = vmul.f32 %v136, %v286
    %v372 = vmul.f32 %v136, %v290
    %v373 = vmul.f32 %v141, %v286
    %v374 = vmul.f32 %v141, %v290
    %v375 = vmul.f32 %v146, %v286
    %v376 = vmul.f32 %v146, %v290
    %v377 = vmul.f32 %v151, %v286
    %v378 = vmul.f32 %v151, %v290
    %v379 = vmul.f32 %v156, %v286
    %v380 = vmul.f32 %v156, %v290
    %v381 = vmul.f32 %v161, %v286
    %v382 = vmul.f32 %v161, %v290
    %v383 = vmul.f32 %v166, %v286
    %v384 = vmul.f32 %v166, %v290
    %v385 = vmul.f32 %v171, %v286
    %v386 = vmul.f32 %v171, %v290
    %v387 = vmul.f32 %v176, %v286
    %v388 = vmul.f32 %v176, %v290
    %v389 = vmul.f32 %v181, %v286
    %v390 = vmul.f32 %v181, %v290
    %v391 = vmul.f32 %v186, %v286
    %v392 = vmul.f32 %v186, %v290
    %v393 = vmul.f32 %v191, %v286
    %v394 = vmul.f32 %v191, %v290
    %v395 = vmul.f32 %v196, %v286
    %v396 = vmul.f32 %v196, %v290
    %v397 = vmul.f32 %v201, %v286
    %v398 = vmul.f32 %v201, %v290
    %v399 = vmul.f32 %v206, %v286
    %v400 = vmul.f32 %v206, %v290
    %v401 = vmul.f32 %v211, %v286
    %v402 = vmul.f32 %v211, %v290
    %v403 = vmul.f32 %v216, %v286
    %v404 = vmul.f32 %v216, %v290
    %v405 = vmul.f32 %v221, %v286
    %v406 = vmul.f32 %v221, %v290
    %v407 = vmul.f32 %v226, %v286
    %v408 = vmul.f32 %v226, %v290
    %v409 = vmul.f32 %v231, %v286
    %v410 = vmul.f32 %v231, %v290
    %v411 = vmul.f32 %v236, %v286
    %v412 = vmul.f32 %v236, %v290
    %v413 = vmul.f32 %v241, %v286
    %v414 = vmul.f32 %v241, %v290
    %v415 = vmul.f32 %v246, %v286
    %v416 = vmul.f32 %v246, %v290
    %v417 = vmul.f32 %v251, %v286
    %v418 = vmul.f32 %v251, %v290
    %419 = vset.pattern.permute.xlu0 1
    %420 = vperm.xlu0 %419, %v29
    %v421 = vpop.permute.xlu0 %420
    %423 = vset.pattern.permute.xlu0 1
    %424 = vperm.xlu0 %423, %v30
    %v425 = vpop.permute.xlu0 %424
    %427 = vset.pattern.permute.xlu0 1
    %428 = vperm.xlu0 %427, %v31
    %v429 = vpop.permute.xlu0 %428
    %431 = vset.pattern.permute.xlu0 1
    %432 = vperm.xlu0 %431, %v32
    %v433 = vpop.permute.xlu0 %432
    %435 = vset.pattern.permute.xlu0 1
    %436 = vperm.xlu0 %435, %v33
    %v437 = vpop.permute.xlu0 %436
    %439 = vset.pattern.permute.xlu0 1
    %440 = vperm.xlu0 %439, %v34
    %v441 = vpop.permute.xlu0 %440
    %443 = vset.pattern.permute.xlu0 1
    %444 = vperm.xlu0 %443, %v35
    %v445 = vpop.permute.xlu0 %444
    %447 = vset.pattern.permute.xlu0 1
    %448 = vperm.xlu0 %447, %v36
    %v449 = vpop.permute.xlu0 %448
    %451 = vset.pattern.permute.xlu0 1
    %452 = vperm.xlu0 %451, %v37
    %v453 = vpop.permute.xlu0 %452
    %455 = vset.pattern.permute.xlu0 1
    %456 = vperm.xlu0 %455, %v38
    %v457 = vpop.permute.xlu0 %456
    %459 = vset.pattern.permute.xlu0 1
    %460 = vperm.xlu0 %459, %v39
    %v461 = vpop.permute.xlu0 %460
    %463 = vset.pattern.permute.xlu0 1
    %464 = vperm.xlu0 %463, %v40
    %v465 = vpop.permute.xlu0 %464
    %467 = vset.pattern.permute.xlu0 1
    %468 = vperm.xlu0 %467, %v41
    %v469 = vpop.permute.xlu0 %468
    %471 = vset.pattern.permute.xlu0 1
    %472 = vperm.xlu0 %471, %v42
    %v473 = vpop.permute.xlu0 %472
    %475 = vset.pattern.permute.xlu0 1
    %476 = vperm.xlu0 %475, %v43
    %v477 = vpop.permute.xlu0 %476
    %479 = vset.pattern.permute.xlu0 1
    %480 = vperm.xlu0 %479, %v44
    %v481 = vpop.permute.xlu0 %480
    %483 = vset.pattern.permute.xlu0 1
    %484 = vperm.xlu0 %483, %v45
    %v485 = vpop.permute.xlu0 %484
    %487 = vset.pattern.permute.xlu0 1
    %488 = vperm.xlu0 %487, %v46
    %v489 = vpop.permute.xlu0 %488
    %491 = vset.pattern.permute.xlu0 1
    %492 = vperm.xlu0 %491, %v47
    %v493 = vpop.permute.xlu0 %492
    %495 = vset.pattern.permute.xlu0 1
    %496 = vperm.xlu0 %495, %v48
    %v497 = vpop.permute.xlu0 %496
    %499 = vset.pattern.permute.xlu0 1
    %500 = vperm.xlu0 %499, %v49
    %v501 = vpop.permute.xlu0 %500
    %503 = vset.pattern.permute.xlu0 1
    %504 = vperm.xlu0 %503, %v50
    %v505 = vpop.permute.xlu0 %504
    %507 = vset.pattern.permute.xlu0 1
    %508 = vperm.xlu0 %507, %v51
    %v509 = vpop.permute.xlu0 %508
    %511 = vset.pattern.permute.xlu0 1
    %512 = vperm.xlu0 %511, %v52
    %v513 = vpop.permute.xlu0 %512
    %515 = vset.pattern.permute.xlu0 1
    %516 = vperm.xlu0 %515, %v53
    %v517 = vpop.permute.xlu0 %516
    %519 = vset.pattern.permute.xlu0 1
    %520 = vperm.xlu0 %519, %v54
    %v521 = vpop.permute.xlu0 %520
    %523 = vset.pattern.permute.xlu0 1
    %524 = vperm.xlu0 %523, %v55
    %v525 = vpop.permute.xlu0 %524
    %527 = vset.pattern.permute.xlu0 1
    %528 = vperm.xlu0 %527, %v56
    %v529 = vpop.permute.xlu0 %528
    %531 = vset.pattern.permute.xlu0 1
    %532 = vperm.xlu0 %531, %v57
    %v533 = vpop.permute.xlu0 %532
    %535 = vset.pattern.permute.xlu0 1
    %536 = vperm.xlu0 %535, %v58
    %v537 = vpop.permute.xlu0 %536
    %539 = vset.pattern.permute.xlu0 1
    %540 = vperm.xlu0 %539, %v59
    %v541 = vpop.permute.xlu0 %540
    %543 = vset.pattern.permute.xlu0 1
    %544 = vperm.xlu0 %543, %v60
    %v545 = vpop.permute.xlu0 %544
    %v547 = vlaneseq
    %v548 = vshrl.u32 %v547, 7
    %v549 = vsub.s32 1, %v548
    %v550 = vrot.slane %v27, %v549
    %v551 = vlaneseq
    %v552 = vshrl.u32 %v551, 7
    %v553 = vsub.s32 5, %v552
    %v554 = vrot.slane %v27, %v553
    %v555 = vlaneseq
    %v556 = vshrl.u32 %v555, 7
    %v557 = vsub.s32 1, %v556
    %v558 = vrot.slane %v28, %v557
    %v559 = vlaneseq
    %v560 = vshrl.u32 %v559, 7
    %v561 = vsub.s32 5, %v560
    %v562 = vrot.slane %v28, %v561
    %v567 = vlaneseq
    %v568 = vshrl.u32 %v567, 7
    %v569 = vsub.s32 1, %v568
    %v570 = vrot.slane %v550, %v569
    %v571 = vlaneseq
    %v572 = vshrl.u32 %v571, 7
    %v573 = vsub.s32 1, %v572
    %v574 = vrot.slane %v554, %v573
    %v575 = vlaneseq
    %v576 = vshrl.u32 %v575, 7
    %v577 = vsub.s32 1, %v576
    %v578 = vrot.slane %v558, %v577
    %v579 = vlaneseq
    %v580 = vshrl.u32 %v579, 7
    %v581 = vsub.s32 1, %v580
    %v582 = vrot.slane %v562, %v581
    %v583 = vmul.f32 %v421, %v570
    %v584 = vmul.f32 %v421, %v574
    %v585 = vmul.f32 %v425, %v570
    %v586 = vmul.f32 %v425, %v574
    %v587 = vmul.f32 %v429, %v570
    %v588 = vmul.f32 %v429, %v574
    %v589 = vmul.f32 %v433, %v570
    %v590 = vmul.f32 %v433, %v574
    %v591 = vmul.f32 %v437, %v570
    %v592 = vmul.f32 %v437, %v574
    %v593 = vmul.f32 %v441, %v570
    %v594 = vmul.f32 %v441, %v574
    %v595 = vmul.f32 %v445, %v570
    %v596 = vmul.f32 %v445, %v574
    %v597 = vmul.f32 %v449, %v570
    %v598 = vmul.f32 %v449, %v574
    %v599 = vmul.f32 %v453, %v570
    %v600 = vmul.f32 %v453, %v574
    %v601 = vmul.f32 %v457, %v570
    %v602 = vmul.f32 %v457, %v574
    %v603 = vmul.f32 %v461, %v570
    %v604 = vmul.f32 %v461, %v574
    %v605 = vmul.f32 %v465, %v570
    %v606 = vmul.f32 %v465, %v574
    %v607 = vmul.f32 %v469, %v570
    %v608 = vmul.f32 %v469, %v574
    %v609 = vmul.f32 %v473, %v570
    %v610 = vmul.f32 %v473, %v574
    %v611 = vmul.f32 %v477, %v570
    %v612 = vmul.f32 %v477, %v574
    %v613 = vmul.f32 %v481, %v570
    %v614 = vmul.f32 %v481, %v574
    %v615 = vmul.f32 %v485, %v570
    %v616 = vmul.f32 %v485, %v574
    %v617 = vmul.f32 %v489, %v570
    %v618 = vmul.f32 %v489, %v574
    %v619 = vmul.f32 %v493, %v570
    %v620 = vmul.f32 %v493, %v574
    %v621 = vmul.f32 %v497, %v570
    %v622 = vmul.f32 %v497, %v574
    %v623 = vmul.f32 %v501, %v570
    %v624 = vmul.f32 %v501, %v574
    %v625 = vmul.f32 %v505, %v570
    %v626 = vmul.f32 %v505, %v574
    %v627 = vmul.f32 %v509, %v570
    %v628 = vmul.f32 %v509, %v574
    %v629 = vmul.f32 %v513, %v570
    %v630 = vmul.f32 %v513, %v574
    %v631 = vmul.f32 %v517, %v570
    %v632 = vmul.f32 %v517, %v574
    %v633 = vmul.f32 %v521, %v570
    %v634 = vmul.f32 %v521, %v574
    %v635 = vmul.f32 %v525, %v570
    %v636 = vmul.f32 %v525, %v574
    %v637 = vmul.f32 %v529, %v570
    %v638 = vmul.f32 %v529, %v574
    %v639 = vmul.f32 %v533, %v570
    %v640 = vmul.f32 %v533, %v574
    %v641 = vmul.f32 %v537, %v570
    %v642 = vmul.f32 %v537, %v574
    %v643 = vmul.f32 %v541, %v570
    %v644 = vmul.f32 %v541, %v574
    %v645 = vmul.f32 %v545, %v570
    %v646 = vmul.f32 %v545, %v574
    %v647 = vmul.f32 %v421, %v578
    %v648 = vmul.f32 %v421, %v582
    %v649 = vmul.f32 %v425, %v578
    %v650 = vmul.f32 %v425, %v582
    %v651 = vmul.f32 %v429, %v578
    %v652 = vmul.f32 %v429, %v582
    %v653 = vmul.f32 %v433, %v578
    %v654 = vmul.f32 %v433, %v582
    %v655 = vmul.f32 %v437, %v578
    %v656 = vmul.f32 %v437, %v582
    %v657 = vmul.f32 %v441, %v578
    %v658 = vmul.f32 %v441, %v582
    %v659 = vmul.f32 %v445, %v578
    %v660 = vmul.f32 %v445, %v582
    %v661 = vmul.f32 %v449, %v578
    %v662 = vmul.f32 %v449, %v582
    %v663 = vmul.f32 %v453, %v578
    %v664 = vmul.f32 %v453, %v582
    %v665 = vmul.f32 %v457, %v578
    %v666 = vmul.f32 %v457, %v582
    %v667 = vmul.f32 %v461, %v578
    %v668 = vmul.f32 %v461, %v582
    %v669 = vmul.f32 %v465, %v578
    %v670 = vmul.f32 %v465, %v582
    %v671 = vmul.f32 %v469, %v578
    %v672 = vmul.f32 %v469, %v582
    %v673 = vmul.f32 %v473, %v578
    %v674 = vmul.f32 %v473, %v582
    %v675 = vmul.f32 %v477, %v578
    %v676 = vmul.f32 %v477, %v582
    %v677 = vmul.f32 %v481, %v578
    %v678 = vmul.f32 %v481, %v582
    %v679 = vmul.f32 %v485, %v578
    %v680 = vmul.f32 %v485, %v582
    %v681 = vmul.f32 %v489, %v578
    %v682 = vmul.f32 %v489, %v582
    %v683 = vmul.f32 %v493, %v578
    %v684 = vmul.f32 %v493, %v582
    %v685 = vmul.f32 %v497, %v578
    %v686 = vmul.f32 %v497, %v582
    %v687 = vmul.f32 %v501, %v578
    %v688 = vmul.f32 %v501, %v582
    %v689 = vmul.f32 %v505, %v578
    %v690 = vmul.f32 %v505, %v582
    %v691 = vmul.f32 %v509, %v578
    %v692 = vmul.f32 %v509, %v582
    %v693 = vmul.f32 %v513, %v578
    %v694 = vmul.f32 %v513, %v582
    %v695 = vmul.f32 %v517, %v578
    %v696 = vmul.f32 %v517, %v582
    %v697 = vmul.f32 %v521, %v578
    %v698 = vmul.f32 %v521, %v582
    %v699 = vmul.f32 %v525, %v578
    %v700 = vmul.f32 %v525, %v582
    %v701 = vmul.f32 %v529, %v578
    %v702 = vmul.f32 %v529, %v582
    %v703 = vmul.f32 %v533, %v578
    %v704 = vmul.f32 %v533, %v582
    %v705 = vmul.f32 %v537, %v578
    %v706 = vmul.f32 %v537, %v582
    %v707 = vmul.f32 %v541, %v578
    %v708 = vmul.f32 %v541, %v582
    %v709 = vmul.f32 %v545, %v578
    %v710 = vmul.f32 %v545, %v582
    %v711 = vadd.f32 %v291, %v583
    %v712 = vadd.f32 %v292, %v584
    %v713 = vadd.f32 %v293, %v585
    %v714 = vadd.f32 %v294, %v586
    %v715 = vadd.f32 %v295, %v587
    %v716 = vadd.f32 %v296, %v588
    %v717 = vadd.f32 %v297, %v589
    %v718 = vadd.f32 %v298, %v590
    %v719 = vadd.f32 %v299, %v591
    %v720 = vadd.f32 %v300, %v592
    %v721 = vadd.f32 %v301, %v593
    %v722 = vadd.f32 %v302, %v594
    %v723 = vadd.f32 %v303, %v595
    %v724 = vadd.f32 %v304, %v596
    %v725 = vadd.f32 %v305, %v597
    %v726 = vadd.f32 %v306, %v598
    %v727 = vadd.f32 %v307, %v599
    %v728 = vadd.f32 %v308, %v600
    %v729 = vadd.f32 %v309, %v601
    %v730 = vadd.f32 %v310, %v602
    %v731 = vadd.f32 %v311, %v603
    %v732 = vadd.f32 %v312, %v604
    %v733 = vadd.f32 %v313, %v605
    %v734 = vadd.f32 %v314, %v606
    %v735 = vadd.f32 %v315, %v607
    %v736 = vadd.f32 %v316, %v608
    %v737 = vadd.f32 %v317, %v609
    %v738 = vadd.f32 %v318, %v610
    %v739 = vadd.f32 %v319, %v611
    %v740 = vadd.f32 %v320, %v612
    %v741 = vadd.f32 %v321, %v613
    %v742 = vadd.f32 %v322, %v614
    %v743 = vadd.f32 %v323, %v615
    %v744 = vadd.f32 %v324, %v616
    %v745 = vadd.f32 %v325, %v617
    %v746 = vadd.f32 %v326, %v618
    %v747 = vadd.f32 %v327, %v619
    %v748 = vadd.f32 %v328, %v620
    %v749 = vadd.f32 %v329, %v621
    %v750 = vadd.f32 %v330, %v622
    %v751 = vadd.f32 %v331, %v623
    %v752 = vadd.f32 %v332, %v624
    %v753 = vadd.f32 %v333, %v625
    %v754 = vadd.f32 %v334, %v626
    %v755 = vadd.f32 %v335, %v627
    %v756 = vadd.f32 %v336, %v628
    %v757 = vadd.f32 %v337, %v629
    %v758 = vadd.f32 %v338, %v630
    %v759 = vadd.f32 %v339, %v631
    %v760 = vadd.f32 %v340, %v632
    %v761 = vadd.f32 %v341, %v633
    %v762 = vadd.f32 %v342, %v634
    %v763 = vadd.f32 %v343, %v635
    %v764 = vadd.f32 %v344, %v636
    %v765 = vadd.f32 %v345, %v637
    %v766 = vadd.f32 %v346, %v638
    %v767 = vadd.f32 %v347, %v639
    %v768 = vadd.f32 %v348, %v640
    %v769 = vadd.f32 %v349, %v641
    %v770 = vadd.f32 %v350, %v642
    %v771 = vadd.f32 %v351, %v643
    %v772 = vadd.f32 %v352, %v644
    %v773 = vadd.f32 %v353, %v645
    %v774 = vadd.f32 %v354, %v646
    %v775 = vadd.f32 %v355, %v647
    %v776 = vadd.f32 %v356, %v648
    %v777 = vadd.f32 %v357, %v649
    %v778 = vadd.f32 %v358, %v650
    %v779 = vadd.f32 %v359, %v651
    %v780 = vadd.f32 %v360, %v652
    %v781 = vadd.f32 %v361, %v653
    %v782 = vadd.f32 %v362, %v654
    %v783 = vadd.f32 %v363, %v655
    %v784 = vadd.f32 %v364, %v656
    %v785 = vadd.f32 %v365, %v657
    %v786 = vadd.f32 %v366, %v658
    %v787 = vadd.f32 %v367, %v659
    %v788 = vadd.f32 %v368, %v660
    %v789 = vadd.f32 %v369, %v661
    %v790 = vadd.f32 %v370, %v662
    %v791 = vadd.f32 %v371, %v663
    %v792 = vadd.f32 %v372, %v664
    %v793 = vadd.f32 %v373, %v665
    %v794 = vadd.f32 %v374, %v666
    %v795 = vadd.f32 %v375, %v667
    %v796 = vadd.f32 %v376, %v668
    %v797 = vadd.f32 %v377, %v669
    %v798 = vadd.f32 %v378, %v670
    %v799 = vadd.f32 %v379, %v671
    %v800 = vadd.f32 %v380, %v672
    %v801 = vadd.f32 %v381, %v673
    %v802 = vadd.f32 %v382, %v674
    %v803 = vadd.f32 %v383, %v675
    %v804 = vadd.f32 %v384, %v676
    %v805 = vadd.f32 %v385, %v677
    %v806 = vadd.f32 %v386, %v678
    %v807 = vadd.f32 %v387, %v679
    %v808 = vadd.f32 %v388, %v680
    %v809 = vadd.f32 %v389, %v681
    %v810 = vadd.f32 %v390, %v682
    %v811 = vadd.f32 %v391, %v683
    %v812 = vadd.f32 %v392, %v684
    %v813 = vadd.f32 %v393, %v685
    %v814 = vadd.f32 %v394, %v686
    %v815 = vadd.f32 %v395, %v687
    %v816 = vadd.f32 %v396, %v688
    %v817 = vadd.f32 %v397, %v689
    %v818 = vadd.f32 %v398, %v690
    %v819 = vadd.f32 %v399, %v691
    %v820 = vadd.f32 %v400, %v692
    %v821 = vadd.f32 %v401, %v693
    %v822 = vadd.f32 %v402, %v694
    %v823 = vadd.f32 %v403, %v695
    %v824 = vadd.f32 %v404, %v696
    %v825 = vadd.f32 %v405, %v697
    %v826 = vadd.f32 %v406, %v698
    %v827 = vadd.f32 %v407, %v699
    %v828 = vadd.f32 %v408, %v700
    %v829 = vadd.f32 %v409, %v701
    %v830 = vadd.f32 %v410, %v702
    %v831 = vadd.f32 %v411, %v703
    %v832 = vadd.f32 %v412, %v704
    %v833 = vadd.f32 %v413, %v705
    %v834 = vadd.f32 %v414, %v706
    %v835 = vadd.f32 %v415, %v707
    %v836 = vadd.f32 %v416, %v708
    %v837 = vadd.f32 %v417, %v709
    %v838 = vadd.f32 %v418, %v710
    %839 = vset.pattern.permute.xlu0 2
    %840 = vperm.xlu0 %839, %v29
    %v841 = vpop.permute.xlu0 %840
    %843 = vset.pattern.permute.xlu0 2
    %844 = vperm.xlu0 %843, %v30
    %v845 = vpop.permute.xlu0 %844
    %847 = vset.pattern.permute.xlu0 2
    %848 = vperm.xlu0 %847, %v31
    %v849 = vpop.permute.xlu0 %848
    %851 = vset.pattern.permute.xlu0 2
    %852 = vperm.xlu0 %851, %v32
    %v853 = vpop.permute.xlu0 %852
    %855 = vset.pattern.permute.xlu0 2
    %856 = vperm.xlu0 %855, %v33
    %v857 = vpop.permute.xlu0 %856
    %859 = vset.pattern.permute.xlu0 2
    %860 = vperm.xlu0 %859, %v34
    %v861 = vpop.permute.xlu0 %860
    %863 = vset.pattern.permute.xlu0 2
    %864 = vperm.xlu0 %863, %v35
    %v865 = vpop.permute.xlu0 %864
    %867 = vset.pattern.permute.xlu0 2
    %868 = vperm.xlu0 %867, %v36
    %v869 = vpop.permute.xlu0 %868
    %871 = vset.pattern.permute.xlu0 2
    %872 = vperm.xlu0 %871, %v37
    %v873 = vpop.permute.xlu0 %872
    %875 = vset.pattern.permute.xlu0 2
    %876 = vperm.xlu0 %875, %v38
    %v877 = vpop.permute.xlu0 %876
    %879 = vset.pattern.permute.xlu0 2
    %880 = vperm.xlu0 %879, %v39
    %v881 = vpop.permute.xlu0 %880
    %883 = vset.pattern.permute.xlu0 2
    %884 = vperm.xlu0 %883, %v40
    %v885 = vpop.permute.xlu0 %884
    %887 = vset.pattern.permute.xlu0 2
    %888 = vperm.xlu0 %887, %v41
    %v889 = vpop.permute.xlu0 %888
    %891 = vset.pattern.permute.xlu0 2
    %892 = vperm.xlu0 %891, %v42
    %v893 = vpop.permute.xlu0 %892
    %895 = vset.pattern.permute.xlu0 2
    %896 = vperm.xlu0 %895, %v43
    %v897 = vpop.permute.xlu0 %896
    %899 = vset.pattern.permute.xlu0 2
    %900 = vperm.xlu0 %899, %v44
    %v901 = vpop.permute.xlu0 %900
    %903 = vset.pattern.permute.xlu0 2
    %904 = vperm.xlu0 %903, %v45
    %v905 = vpop.permute.xlu0 %904
    %907 = vset.pattern.permute.xlu0 2
    %908 = vperm.xlu0 %907, %v46
    %v909 = vpop.permute.xlu0 %908
    %911 = vset.pattern.permute.xlu0 2
    %912 = vperm.xlu0 %911, %v47
    %v913 = vpop.permute.xlu0 %912
    %915 = vset.pattern.permute.xlu0 2
    %916 = vperm.xlu0 %915, %v48
    %v917 = vpop.permute.xlu0 %916
    %919 = vset.pattern.permute.xlu0 2
    %920 = vperm.xlu0 %919, %v49
    %v921 = vpop.permute.xlu0 %920
    %923 = vset.pattern.permute.xlu0 2
    %924 = vperm.xlu0 %923, %v50
    %v925 = vpop.permute.xlu0 %924
    %927 = vset.pattern.permute.xlu0 2
    %928 = vperm.xlu0 %927, %v51
    %v929 = vpop.permute.xlu0 %928
    %931 = vset.pattern.permute.xlu0 2
    %932 = vperm.xlu0 %931, %v52
    %v933 = vpop.permute.xlu0 %932
    %935 = vset.pattern.permute.xlu0 2
    %936 = vperm.xlu0 %935, %v53
    %v937 = vpop.permute.xlu0 %936
    %939 = vset.pattern.permute.xlu0 2
    %940 = vperm.xlu0 %939, %v54
    %v941 = vpop.permute.xlu0 %940
    %943 = vset.pattern.permute.xlu0 2
    %944 = vperm.xlu0 %943, %v55
    %v945 = vpop.permute.xlu0 %944
    %947 = vset.pattern.permute.xlu0 2
    %948 = vperm.xlu0 %947, %v56
    %v949 = vpop.permute.xlu0 %948
    %951 = vset.pattern.permute.xlu0 2
    %952 = vperm.xlu0 %951, %v57
    %v953 = vpop.permute.xlu0 %952
    %955 = vset.pattern.permute.xlu0 2
    %956 = vperm.xlu0 %955, %v58
    %v957 = vpop.permute.xlu0 %956
    %959 = vset.pattern.permute.xlu0 2
    %960 = vperm.xlu0 %959, %v59
    %v961 = vpop.permute.xlu0 %960
    %963 = vset.pattern.permute.xlu0 2
    %964 = vperm.xlu0 %963, %v60
    %v965 = vpop.permute.xlu0 %964
    %v967 = vlaneseq
    %v968 = vshrl.u32 %v967, 7
    %v969 = vsub.s32 2, %v968
    %v970 = vrot.slane %v27, %v969
    %v971 = vlaneseq
    %v972 = vshrl.u32 %v971, 7
    %v973 = vsub.s32 6, %v972
    %v974 = vrot.slane %v27, %v973
    %v975 = vlaneseq
    %v976 = vshrl.u32 %v975, 7
    %v977 = vsub.s32 2, %v976
    %v978 = vrot.slane %v28, %v977
    %v979 = vlaneseq
    %v980 = vshrl.u32 %v979, 7
    %v981 = vsub.s32 6, %v980
    %v982 = vrot.slane %v28, %v981
    %v987 = vlaneseq
    %v988 = vshrl.u32 %v987, 7
    %v989 = vsub.s32 2, %v988
    %v990 = vrot.slane %v970, %v989
    %v991 = vlaneseq
    %v992 = vshrl.u32 %v991, 7
    %v993 = vsub.s32 2, %v992
    %v994 = vrot.slane %v974, %v993
    %v995 = vlaneseq
    %v996 = vshrl.u32 %v995, 7
    %v997 = vsub.s32 2, %v996
    %v998 = vrot.slane %v978, %v997
    %v999 = vlaneseq
    %v1000 = vshrl.u32 %v999, 7
    %v1001 = vsub.s32 2, %v1000
    %v1002 = vrot.slane %v982, %v1001
    %v1003 = vmul.f32 %v841, %v990
    %v1004 = vmul.f32 %v841, %v994
    %v1005 = vmul.f32 %v845, %v990
    %v1006 = vmul.f32 %v845, %v994
    %v1007 = vmul.f32 %v849, %v990
    %v1008 = vmul.f32 %v849, %v994
    %v1009 = vmul.f32 %v853, %v990
    %v1010 = vmul.f32 %v853, %v994
    %v1011 = vmul.f32 %v857, %v990
    %v1012 = vmul.f32 %v857, %v994
    %v1013 = vmul.f32 %v861, %v990
    %v1014 = vmul.f32 %v861, %v994
    %v1015 = vmul.f32 %v865, %v990
    %v1016 = vmul.f32 %v865, %v994
    %v1017 = vmul.f32 %v869, %v990
    %v1018 = vmul.f32 %v869, %v994
    %v1019 = vmul.f32 %v873, %v990
    %v1020 = vmul.f32 %v873, %v994
    %v1021 = vmul.f32 %v877, %v990
    %v1022 = vmul.f32 %v877, %v994
    %v1023 = vmul.f32 %v881, %v990
    %v1024 = vmul.f32 %v881, %v994
    %v1025 = vmul.f32 %v885, %v990
    %v1026 = vmul.f32 %v885, %v994
    %v1027 = vmul.f32 %v889, %v990
    %v1028 = vmul.f32 %v889, %v994
    %v1029 = vmul.f32 %v893, %v990
    %v1030 = vmul.f32 %v893, %v994
    %v1031 = vmul.f32 %v897, %v990
    %v1032 = vmul.f32 %v897, %v994
    %v1033 = vmul.f32 %v901, %v990
    %v1034 = vmul.f32 %v901, %v994
    %v1035 = vmul.f32 %v905, %v990
    %v1036 = vmul.f32 %v905, %v994
    %v1037 = vmul.f32 %v909, %v990
    %v1038 = vmul.f32 %v909, %v994
    %v1039 = vmul.f32 %v913, %v990
    %v1040 = vmul.f32 %v913, %v994
    %v1041 = vmul.f32 %v917, %v990
    %v1042 = vmul.f32 %v917, %v994
    %v1043 = vmul.f32 %v921, %v990
    %v1044 = vmul.f32 %v921, %v994
    %v1045 = vmul.f32 %v925, %v990
    %v1046 = vmul.f32 %v925, %v994
    %v1047 = vmul.f32 %v929, %v990
    %v1048 = vmul.f32 %v929, %v994
    %v1049 = vmul.f32 %v933, %v990
    %v1050 = vmul.f32 %v933, %v994
    %v1051 = vmul.f32 %v937, %v990
    %v1052 = vmul.f32 %v937, %v994
    %v1053 = vmul.f32 %v941, %v990
    %v1054 = vmul.f32 %v941, %v994
    %v1055 = vmul.f32 %v945, %v990
    %v1056 = vmul.f32 %v945, %v994
    %v1057 = vmul.f32 %v949, %v990
    %v1058 = vmul.f32 %v949, %v994
    %v1059 = vmul.f32 %v953, %v990
    %v1060 = vmul.f32 %v953, %v994
    %v1061 = vmul.f32 %v957, %v990
    %v1062 = vmul.f32 %v957, %v994
    %v1063 = vmul.f32 %v961, %v990
    %v1064 = vmul.f32 %v961, %v994
    %v1065 = vmul.f32 %v965, %v990
    %v1066 = vmul.f32 %v965, %v994
    %v1067 = vmul.f32 %v841, %v998
    %v1068 = vmul.f32 %v841, %v1002
    %v1069 = vmul.f32 %v845, %v998
    %v1070 = vmul.f32 %v845, %v1002
    %v1071 = vmul.f32 %v849, %v998
    %v1072 = vmul.f32 %v849, %v1002
    %v1073 = vmul.f32 %v853, %v998
    %v1074 = vmul.f32 %v853, %v1002
    %v1075 = vmul.f32 %v857, %v998
    %v1076 = vmul.f32 %v857, %v1002
    %v1077 = vmul.f32 %v861, %v998
    %v1078 = vmul.f32 %v861, %v1002
    %v1079 = vmul.f32 %v865, %v998
    %v1080 = vmul.f32 %v865, %v1002
    %v1081 = vmul.f32 %v869, %v998
    %v1082 = vmul.f32 %v869, %v1002
    %v1083 = vmul.f32 %v873, %v998
    %v1084 = vmul.f32 %v873, %v1002
    %v1085 = vmul.f32 %v877, %v998
    %v1086 = vmul.f32 %v877, %v1002
    %v1087 = vmul.f32 %v881, %v998
    %v1088 = vmul.f32 %v881, %v1002
    %v1089 = vmul.f32 %v885, %v998
    %v1090 = vmul.f32 %v885, %v1002
    %v1091 = vmul.f32 %v889, %v998
    %v1092 = vmul.f32 %v889, %v1002
    %v1093 = vmul.f32 %v893, %v998
    %v1094 = vmul.f32 %v893, %v1002
    %v1095 = vmul.f32 %v897, %v998
    %v1096 = vmul.f32 %v897, %v1002
    %v1097 = vmul.f32 %v901, %v998
    %v1098 = vmul.f32 %v901, %v1002
    %v1099 = vmul.f32 %v905, %v998
    %v1100 = vmul.f32 %v905, %v1002
    %v1101 = vmul.f32 %v909, %v998
    %v1102 = vmul.f32 %v909, %v1002
    %v1103 = vmul.f32 %v913, %v998
    %v1104 = vmul.f32 %v913, %v1002
    %v1105 = vmul.f32 %v917, %v998
    %v1106 = vmul.f32 %v917, %v1002
    %v1107 = vmul.f32 %v921, %v998
    %v1108 = vmul.f32 %v921, %v1002
    %v1109 = vmul.f32 %v925, %v998
    %v1110 = vmul.f32 %v925, %v1002
    %v1111 = vmul.f32 %v929, %v998
    %v1112 = vmul.f32 %v929, %v1002
    %v1113 = vmul.f32 %v933, %v998
    %v1114 = vmul.f32 %v933, %v1002
    %v1115 = vmul.f32 %v937, %v998
    %v1116 = vmul.f32 %v937, %v1002
    %v1117 = vmul.f32 %v941, %v998
    %v1118 = vmul.f32 %v941, %v1002
    %v1119 = vmul.f32 %v945, %v998
    %v1120 = vmul.f32 %v945, %v1002
    %v1121 = vmul.f32 %v949, %v998
    %v1122 = vmul.f32 %v949, %v1002
    %v1123 = vmul.f32 %v953, %v998
    %v1124 = vmul.f32 %v953, %v1002
    %v1125 = vmul.f32 %v957, %v998
    %v1126 = vmul.f32 %v957, %v1002
    %v1127 = vmul.f32 %v961, %v998
    %v1128 = vmul.f32 %v961, %v1002
    %v1129 = vmul.f32 %v965, %v998
    %v1130 = vmul.f32 %v965, %v1002
    %v1131 = vadd.f32 %v711, %v1003
    %v1132 = vadd.f32 %v712, %v1004
    %v1133 = vadd.f32 %v713, %v1005
    %v1134 = vadd.f32 %v714, %v1006
    %v1135 = vadd.f32 %v715, %v1007
    %v1136 = vadd.f32 %v716, %v1008
    %v1137 = vadd.f32 %v717, %v1009
    %v1138 = vadd.f32 %v718, %v1010
    %v1139 = vadd.f32 %v719, %v1011
    %v1140 = vadd.f32 %v720, %v1012
    %v1141 = vadd.f32 %v721, %v1013
    %v1142 = vadd.f32 %v722, %v1014
    %v1143 = vadd.f32 %v723, %v1015
    %v1144 = vadd.f32 %v724, %v1016
    %v1145 = vadd.f32 %v725, %v1017
    %v1146 = vadd.f32 %v726, %v1018
    %v1147 = vadd.f32 %v727, %v1019
    %v1148 = vadd.f32 %v728, %v1020
    %v1149 = vadd.f32 %v729, %v1021
    %v1150 = vadd.f32 %v730, %v1022
    %v1151 = vadd.f32 %v731, %v1023
    %v1152 = vadd.f32 %v732, %v1024
    %v1153 = vadd.f32 %v733, %v1025
    %v1154 = vadd.f32 %v734, %v1026
    %v1155 = vadd.f32 %v735, %v1027
    %v1156 = vadd.f32 %v736, %v1028
    %v1157 = vadd.f32 %v737, %v1029
    %v1158 = vadd.f32 %v738, %v1030
    %v1159 = vadd.f32 %v739, %v1031
    %v1160 = vadd.f32 %v740, %v1032
    %v1161 = vadd.f32 %v741, %v1033
    %v1162 = vadd.f32 %v742, %v1034
    %v1163 = vadd.f32 %v743, %v1035
    %v1164 = vadd.f32 %v744, %v1036
    %v1165 = vadd.f32 %v745, %v1037
    %v1166 = vadd.f32 %v746, %v1038
    %v1167 = vadd.f32 %v747, %v1039
    %v1168 = vadd.f32 %v748, %v1040
    %v1169 = vadd.f32 %v749, %v1041
    %v1170 = vadd.f32 %v750, %v1042
    %v1171 = vadd.f32 %v751, %v1043
    %v1172 = vadd.f32 %v752, %v1044
    %v1173 = vadd.f32 %v753, %v1045
    %v1174 = vadd.f32 %v754, %v1046
    %v1175 = vadd.f32 %v755, %v1047
    %v1176 = vadd.f32 %v756, %v1048
    %v1177 = vadd.f32 %v757, %v1049
    %v1178 = vadd.f32 %v758, %v1050
    %v1179 = vadd.f32 %v759, %v1051
    %v1180 = vadd.f32 %v760, %v1052
    %v1181 = vadd.f32 %v761, %v1053
    %v1182 = vadd.f32 %v762, %v1054
    %v1183 = vadd.f32 %v763, %v1055
    %v1184 = vadd.f32 %v764, %v1056
    %v1185 = vadd.f32 %v765, %v1057
    %v1186 = vadd.f32 %v766, %v1058
    %v1187 = vadd.f32 %v767, %v1059
    %v1188 = vadd.f32 %v768, %v1060
    %v1189 = vadd.f32 %v769, %v1061
    %v1190 = vadd.f32 %v770, %v1062
    %v1191 = vadd.f32 %v771, %v1063
    %v1192 = vadd.f32 %v772, %v1064
    %v1193 = vadd.f32 %v773, %v1065
    %v1194 = vadd.f32 %v774, %v1066
    %v1195 = vadd.f32 %v775, %v1067
    %v1196 = vadd.f32 %v776, %v1068
    %v1197 = vadd.f32 %v777, %v1069
    %v1198 = vadd.f32 %v778, %v1070
    %v1199 = vadd.f32 %v779, %v1071
    %v1200 = vadd.f32 %v780, %v1072
    %v1201 = vadd.f32 %v781, %v1073
    %v1202 = vadd.f32 %v782, %v1074
    %v1203 = vadd.f32 %v783, %v1075
    %v1204 = vadd.f32 %v784, %v1076
    %v1205 = vadd.f32 %v785, %v1077
    %v1206 = vadd.f32 %v786, %v1078
    %v1207 = vadd.f32 %v787, %v1079
    %v1208 = vadd.f32 %v788, %v1080
    %v1209 = vadd.f32 %v789, %v1081
    %v1210 = vadd.f32 %v790, %v1082
    %v1211 = vadd.f32 %v791, %v1083
    %v1212 = vadd.f32 %v792, %v1084
    %v1213 = vadd.f32 %v793, %v1085
    %v1214 = vadd.f32 %v794, %v1086
    %v1215 = vadd.f32 %v795, %v1087
    %v1216 = vadd.f32 %v796, %v1088
    %v1217 = vadd.f32 %v797, %v1089
    %v1218 = vadd.f32 %v798, %v1090
    %v1219 = vadd.f32 %v799, %v1091
    %v1220 = vadd.f32 %v800, %v1092
    %v1221 = vadd.f32 %v801, %v1093
    %v1222 = vadd.f32 %v802, %v1094
    %v1223 = vadd.f32 %v803, %v1095
    %v1224 = vadd.f32 %v804, %v1096
    %v1225 = vadd.f32 %v805, %v1097
    %v1226 = vadd.f32 %v806, %v1098
    %v1227 = vadd.f32 %v807, %v1099
    %v1228 = vadd.f32 %v808, %v1100
    %v1229 = vadd.f32 %v809, %v1101
    %v1230 = vadd.f32 %v810, %v1102
    %v1231 = vadd.f32 %v811, %v1103
    %v1232 = vadd.f32 %v812, %v1104
    %v1233 = vadd.f32 %v813, %v1105
    %v1234 = vadd.f32 %v814, %v1106
    %v1235 = vadd.f32 %v815, %v1107
    %v1236 = vadd.f32 %v816, %v1108
    %v1237 = vadd.f32 %v817, %v1109
    %v1238 = vadd.f32 %v818, %v1110
    %v1239 = vadd.f32 %v819, %v1111
    %v1240 = vadd.f32 %v820, %v1112
    %v1241 = vadd.f32 %v821, %v1113
    %v1242 = vadd.f32 %v822, %v1114
    %v1243 = vadd.f32 %v823, %v1115
    %v1244 = vadd.f32 %v824, %v1116
    %v1245 = vadd.f32 %v825, %v1117
    %v1246 = vadd.f32 %v826, %v1118
    %v1247 = vadd.f32 %v827, %v1119
    %v1248 = vadd.f32 %v828, %v1120
    %v1249 = vadd.f32 %v829, %v1121
    %v1250 = vadd.f32 %v830, %v1122
    %v1251 = vadd.f32 %v831, %v1123
    %v1252 = vadd.f32 %v832, %v1124
    %v1253 = vadd.f32 %v833, %v1125
    %v1254 = vadd.f32 %v834, %v1126
    %v1255 = vadd.f32 %v835, %v1127
    %v1256 = vadd.f32 %v836, %v1128
    %v1257 = vadd.f32 %v837, %v1129
    %v1258 = vadd.f32 %v838, %v1130
    %1260 = vset.pattern.permute.xlu0 0
    %1261 = vperm.xlu0 %1260, %v61
    %v1262 = vpop.permute.xlu0 %1261
    %1265 = vset.pattern.permute.xlu0 0
    %1266 = vperm.xlu0 %1265, %v62
    %v1267 = vpop.permute.xlu0 %1266
    %1270 = vset.pattern.permute.xlu0 0
    %1271 = vperm.xlu0 %1270, %v63
    %v1272 = vpop.permute.xlu0 %1271
    %1275 = vset.pattern.permute.xlu0 0
    %1276 = vperm.xlu0 %1275, %v64
    %v1277 = vpop.permute.xlu0 %1276
    %1280 = vset.pattern.permute.xlu0 0
    %1281 = vperm.xlu0 %1280, %v65
    %v1282 = vpop.permute.xlu0 %1281
    %1285 = vset.pattern.permute.xlu0 0
    %1286 = vperm.xlu0 %1285, %v66
    %v1287 = vpop.permute.xlu0 %1286
    %1290 = vset.pattern.permute.xlu0 0
    %1291 = vperm.xlu0 %1290, %v67
    %v1292 = vpop.permute.xlu0 %1291
    %1295 = vset.pattern.permute.xlu0 0
    %1296 = vperm.xlu0 %1295, %v68
    %v1297 = vpop.permute.xlu0 %1296
    %1300 = vset.pattern.permute.xlu0 0
    %1301 = vperm.xlu0 %1300, %v69
    %v1302 = vpop.permute.xlu0 %1301
    %1305 = vset.pattern.permute.xlu0 0
    %1306 = vperm.xlu0 %1305, %v70
    %v1307 = vpop.permute.xlu0 %1306
    %1310 = vset.pattern.permute.xlu0 0
    %1311 = vperm.xlu0 %1310, %v71
    %v1312 = vpop.permute.xlu0 %1311
    %1315 = vset.pattern.permute.xlu0 0
    %1316 = vperm.xlu0 %1315, %v72
    %v1317 = vpop.permute.xlu0 %1316
    %1320 = vset.pattern.permute.xlu0 0
    %1321 = vperm.xlu0 %1320, %v73
    %v1322 = vpop.permute.xlu0 %1321
    %1325 = vset.pattern.permute.xlu0 0
    %1326 = vperm.xlu0 %1325, %v74
    %v1327 = vpop.permute.xlu0 %1326
    %1330 = vset.pattern.permute.xlu0 0
    %1331 = vperm.xlu0 %1330, %v75
    %v1332 = vpop.permute.xlu0 %1331
    %1335 = vset.pattern.permute.xlu0 0
    %1336 = vperm.xlu0 %1335, %v76
    %v1337 = vpop.permute.xlu0 %1336
    %1340 = vset.pattern.permute.xlu0 0
    %1341 = vperm.xlu0 %1340, %v77
    %v1342 = vpop.permute.xlu0 %1341
    %1345 = vset.pattern.permute.xlu0 0
    %1346 = vperm.xlu0 %1345, %v78
    %v1347 = vpop.permute.xlu0 %1346
    %1350 = vset.pattern.permute.xlu0 0
    %1351 = vperm.xlu0 %1350, %v79
    %v1352 = vpop.permute.xlu0 %1351
    %1355 = vset.pattern.permute.xlu0 0
    %1356 = vperm.xlu0 %1355, %v80
    %v1357 = vpop.permute.xlu0 %1356
    %1360 = vset.pattern.permute.xlu0 0
    %1361 = vperm.xlu0 %1360, %v81
    %v1362 = vpop.permute.xlu0 %1361
    %1365 = vset.pattern.permute.xlu0 0
    %1366 = vperm.xlu0 %1365, %v82
    %v1367 = vpop.permute.xlu0 %1366
    %1370 = vset.pattern.permute.xlu0 0
    %1371 = vperm.xlu0 %1370, %v83
    %v1372 = vpop.permute.xlu0 %1371
    %1375 = vset.pattern.permute.xlu0 0
    %1376 = vperm.xlu0 %1375, %v84
    %v1377 = vpop.permute.xlu0 %1376
    %1380 = vset.pattern.permute.xlu0 0
    %1381 = vperm.xlu0 %1380, %v85
    %v1382 = vpop.permute.xlu0 %1381
    %1385 = vset.pattern.permute.xlu0 0
    %1386 = vperm.xlu0 %1385, %v86
    %v1387 = vpop.permute.xlu0 %1386
    %1390 = vset.pattern.permute.xlu0 0
    %1391 = vperm.xlu0 %1390, %v87
    %v1392 = vpop.permute.xlu0 %1391
    %1395 = vset.pattern.permute.xlu0 0
    %1396 = vperm.xlu0 %1395, %v88
    %v1397 = vpop.permute.xlu0 %1396
    %1400 = vset.pattern.permute.xlu0 0
    %1401 = vperm.xlu0 %1400, %v89
    %v1402 = vpop.permute.xlu0 %1401
    %1405 = vset.pattern.permute.xlu0 0
    %1406 = vperm.xlu0 %1405, %v90
    %v1407 = vpop.permute.xlu0 %1406
    %1410 = vset.pattern.permute.xlu0 0
    %1411 = vperm.xlu0 %1410, %v91
    %v1412 = vpop.permute.xlu0 %1411
    %1415 = vset.pattern.permute.xlu0 0
    %1416 = vperm.xlu0 %1415, %v92
    %v1417 = vpop.permute.xlu0 %1416
    %v1419 = vadd.f32 %v1131, %v1262
    %v1420 = vadd.f32 %v1132, %v1262
    %v1421 = vadd.f32 %v1133, %v1267
    %v1422 = vadd.f32 %v1134, %v1267
    %v1423 = vadd.f32 %v1135, %v1272
    %v1424 = vadd.f32 %v1136, %v1272
    %v1425 = vadd.f32 %v1137, %v1277
    %v1426 = vadd.f32 %v1138, %v1277
    %v1427 = vadd.f32 %v1139, %v1282
    %v1428 = vadd.f32 %v1140, %v1282
    %v1429 = vadd.f32 %v1141, %v1287
    %v1430 = vadd.f32 %v1142, %v1287
    %v1431 = vadd.f32 %v1143, %v1292
    %v1432 = vadd.f32 %v1144, %v1292
    %v1433 = vadd.f32 %v1145, %v1297
    %v1434 = vadd.f32 %v1146, %v1297
    %v1435 = vadd.f32 %v1147, %v1302
    %v1436 = vadd.f32 %v1148, %v1302
    %v1437 = vadd.f32 %v1149, %v1307
    %v1438 = vadd.f32 %v1150, %v1307
    %v1439 = vadd.f32 %v1151, %v1312
    %v1440 = vadd.f32 %v1152, %v1312
    %v1441 = vadd.f32 %v1153, %v1317
    %v1442 = vadd.f32 %v1154, %v1317
    %v1443 = vadd.f32 %v1155, %v1322
    %v1444 = vadd.f32 %v1156, %v1322
    %v1445 = vadd.f32 %v1157, %v1327
    %v1446 = vadd.f32 %v1158, %v1327
    %v1447 = vadd.f32 %v1159, %v1332
    %v1448 = vadd.f32 %v1160, %v1332
    %v1449 = vadd.f32 %v1161, %v1337
    %v1450 = vadd.f32 %v1162, %v1337
    %v1451 = vadd.f32 %v1163, %v1342
    %v1452 = vadd.f32 %v1164, %v1342
    %v1453 = vadd.f32 %v1165, %v1347
    %v1454 = vadd.f32 %v1166, %v1347
    %v1455 = vadd.f32 %v1167, %v1352
    %v1456 = vadd.f32 %v1168, %v1352
    %v1457 = vadd.f32 %v1169, %v1357
    %v1458 = vadd.f32 %v1170, %v1357
    %v1459 = vadd.f32 %v1171, %v1362
    %v1460 = vadd.f32 %v1172, %v1362
    %v1461 = vadd.f32 %v1173, %v1367
    %v1462 = vadd.f32 %v1174, %v1367
    %v1463 = vadd.f32 %v1175, %v1372
    %v1464 = vadd.f32 %v1176, %v1372
    %v1465 = vadd.f32 %v1177, %v1377
    %v1466 = vadd.f32 %v1178, %v1377
    %v1467 = vadd.f32 %v1179, %v1382
    %v1468 = vadd.f32 %v1180, %v1382
    %v1469 = vadd.f32 %v1181, %v1387
    %v1470 = vadd.f32 %v1182, %v1387
    %v1471 = vadd.f32 %v1183, %v1392
    %v1472 = vadd.f32 %v1184, %v1392
    %v1473 = vadd.f32 %v1185, %v1397
    %v1474 = vadd.f32 %v1186, %v1397
    %v1475 = vadd.f32 %v1187, %v1402
    %v1476 = vadd.f32 %v1188, %v1402
    %v1477 = vadd.f32 %v1189, %v1407
    %v1478 = vadd.f32 %v1190, %v1407
    %v1479 = vadd.f32 %v1191, %v1412
    %v1480 = vadd.f32 %v1192, %v1412
    %v1481 = vadd.f32 %v1193, %v1417
    %v1482 = vadd.f32 %v1194, %v1417
    %v1483 = vadd.f32 %v1195, %v1262
    %v1484 = vadd.f32 %v1196, %v1262
    %v1485 = vadd.f32 %v1197, %v1267
    %v1486 = vadd.f32 %v1198, %v1267
    %v1487 = vadd.f32 %v1199, %v1272
    %v1488 = vadd.f32 %v1200, %v1272
    %v1489 = vadd.f32 %v1201, %v1277
    %v1490 = vadd.f32 %v1202, %v1277
    %v1491 = vadd.f32 %v1203, %v1282
    %v1492 = vadd.f32 %v1204, %v1282
    %v1493 = vadd.f32 %v1205, %v1287
    %v1494 = vadd.f32 %v1206, %v1287
    %v1495 = vadd.f32 %v1207, %v1292
    %v1496 = vadd.f32 %v1208, %v1292
    %v1497 = vadd.f32 %v1209, %v1297
    %v1498 = vadd.f32 %v1210, %v1297
    %v1499 = vadd.f32 %v1211, %v1302
    %v1500 = vadd.f32 %v1212, %v1302
    %v1501 = vadd.f32 %v1213, %v1307
    %v1502 = vadd.f32 %v1214, %v1307
    %v1503 = vadd.f32 %v1215, %v1312
    %v1504 = vadd.f32 %v1216, %v1312
    %v1505 = vadd.f32 %v1217, %v1317
    %v1506 = vadd.f32 %v1218, %v1317
    %v1507 = vadd.f32 %v1219, %v1322
    %v1508 = vadd.f32 %v1220, %v1322
    %v1509 = vadd.f32 %v1221, %v1327
    %v1510 = vadd.f32 %v1222, %v1327
    %v1511 = vadd.f32 %v1223, %v1332
    %v1512 = vadd.f32 %v1224, %v1332
    %v1513 = vadd.f32 %v1225, %v1337
    %v1514 = vadd.f32 %v1226, %v1337
    %v1515 = vadd.f32 %v1227, %v1342
    %v1516 = vadd.f32 %v1228, %v1342
    %v1517 = vadd.f32 %v1229, %v1347
    %v1518 = vadd.f32 %v1230, %v1347
    %v1519 = vadd.f32 %v1231, %v1352
    %v1520 = vadd.f32 %v1232, %v1352
    %v1521 = vadd.f32 %v1233, %v1357
    %v1522 = vadd.f32 %v1234, %v1357
    %v1523 = vadd.f32 %v1235, %v1362
    %v1524 = vadd.f32 %v1236, %v1362
    %v1525 = vadd.f32 %v1237, %v1367
    %v1526 = vadd.f32 %v1238, %v1367
    %v1527 = vadd.f32 %v1239, %v1372
    %v1528 = vadd.f32 %v1240, %v1372
    %v1529 = vadd.f32 %v1241, %v1377
    %v1530 = vadd.f32 %v1242, %v1377
    %v1531 = vadd.f32 %v1243, %v1382
    %v1532 = vadd.f32 %v1244, %v1382
    %v1533 = vadd.f32 %v1245, %v1387
    %v1534 = vadd.f32 %v1246, %v1387
    %v1535 = vadd.f32 %v1247, %v1392
    %v1536 = vadd.f32 %v1248, %v1392
    %v1537 = vadd.f32 %v1249, %v1397
    %v1538 = vadd.f32 %v1250, %v1397
    %v1539 = vadd.f32 %v1251, %v1402
    %v1540 = vadd.f32 %v1252, %v1402
    %v1541 = vadd.f32 %v1253, %v1407
    %v1542 = vadd.f32 %v1254, %v1407
    %v1543 = vadd.f32 %v1255, %v1412
    %v1544 = vadd.f32 %v1256, %v1412
    %v1545 = vadd.f32 %v1257, %v1417
    %v1546 = vadd.f32 %v1258, %v1417
    %v1547 = vmax.f32 %v1419, 0.0
    %v1548 = vmax.f32 %v1420, 0.0
    %v1549 = vmax.f32 %v1421, 0.0
    %v1550 = vmax.f32 %v1422, 0.0
    %v1551 = vmax.f32 %v1423, 0.0
    %v1552 = vmax.f32 %v1424, 0.0
    %v1553 = vmax.f32 %v1425, 0.0
    %v1554 = vmax.f32 %v1426, 0.0
    %v1555 = vmax.f32 %v1427, 0.0
    %v1556 = vmax.f32 %v1428, 0.0
    %v1557 = vmax.f32 %v1429, 0.0
    %v1558 = vmax.f32 %v1430, 0.0
    %v1559 = vmax.f32 %v1431, 0.0
    %v1560 = vmax.f32 %v1432, 0.0
    %v1561 = vmax.f32 %v1433, 0.0
    %v1562 = vmax.f32 %v1434, 0.0
    %v1563 = vmax.f32 %v1435, 0.0
    %v1564 = vmax.f32 %v1436, 0.0
    %v1565 = vmax.f32 %v1437, 0.0
    %v1566 = vmax.f32 %v1438, 0.0
    %v1567 = vmax.f32 %v1439, 0.0
    %v1568 = vmax.f32 %v1440, 0.0
    %v1569 = vmax.f32 %v1441, 0.0
    %v1570 = vmax.f32 %v1442, 0.0
    %v1571 = vmax.f32 %v1443, 0.0
    %v1572 = vmax.f32 %v1444, 0.0
    %v1573 = vmax.f32 %v1445, 0.0
    %v1574 = vmax.f32 %v1446, 0.0
    %v1575 = vmax.f32 %v1447, 0.0
    %v1576 = vmax.f32 %v1448, 0.0
    %v1577 = vmax.f32 %v1449, 0.0
    %v1578 = vmax.f32 %v1450, 0.0
    %v1579 = vmax.f32 %v1451, 0.0
    %v1580 = vmax.f32 %v1452, 0.0
    %v1581 = vmax.f32 %v1453, 0.0
    %v1582 = vmax.f32 %v1454, 0.0
    %v1583 = vmax.f32 %v1455, 0.0
    %v1584 = vmax.f32 %v1456, 0.0
    %v1585 = vmax.f32 %v1457, 0.0
    %v1586 = vmax.f32 %v1458, 0.0
    %v1587 = vmax.f32 %v1459, 0.0
    %v1588 = vmax.f32 %v1460, 0.0
    %v1589 = vmax.f32 %v1461, 0.0
    %v1590 = vmax.f32 %v1462, 0.0
    %v1591 = vmax.f32 %v1463, 0.0
    %v1592 = vmax.f32 %v1464, 0.0
    %v1593 = vmax.f32 %v1465, 0.0
    %v1594 = vmax.f32 %v1466, 0.0
    %v1595 = vmax.f32 %v1467, 0.0
    %v1596 = vmax.f32 %v1468, 0.0
    %v1597 = vmax.f32 %v1469, 0.0
    %v1598 = vmax.f32 %v1470, 0.0
    %v1599 = vmax.f32 %v1471, 0.0
    %v1600 = vmax.f32 %v1472, 0.0
    %v1601 = vmax.f32 %v1473, 0.0
    %v1602 = vmax.f32 %v1474, 0.0
    %v1603 = vmax.f32 %v1475, 0.0
    %v1604 = vmax.f32 %v1476, 0.0
    %v1605 = vmax.f32 %v1477, 0.0
    %v1606 = vmax.f32 %v1478, 0.0
    %v1607 = vmax.f32 %v1479, 0.0
    %v1608 = vmax.f32 %v1480, 0.0
    %v1609 = vmax.f32 %v1481, 0.0
    %v1610 = vmax.f32 %v1482, 0.0
    %v1611 = vmax.f32 %v1483, 0.0
    %v1612 = vmax.f32 %v1484, 0.0
    %v1613 = vmax.f32 %v1485, 0.0
    %v1614 = vmax.f32 %v1486, 0.0
    %v1615 = vmax.f32 %v1487, 0.0
    %v1616 = vmax.f32 %v1488, 0.0
    %v1617 = vmax.f32 %v1489, 0.0
    %v1618 = vmax.f32 %v1490, 0.0
    %v1619 = vmax.f32 %v1491, 0.0
    %v1620 = vmax.f32 %v1492, 0.0
    %v1621 = vmax.f32 %v1493, 0.0
    %v1622 = vmax.f32 %v1494, 0.0
    %v1623 = vmax.f32 %v1495, 0.0
    %v1624 = vmax.f32 %v1496, 0.0
    %v1625 = vmax.f32 %v1497, 0.0
    %v1626 = vmax.f32 %v1498, 0.0
    %v1627 = vmax.f32 %v1499, 0.0
    %v1628 = vmax.f32 %v1500, 0.0
    %v1629 = vmax.f32 %v1501, 0.0
    %v1630 = vmax.f32 %v1502, 0.0
    %v1631 = vmax.f32 %v1503, 0.0
    %v1632 = vmax.f32 %v1504, 0.0
    %v1633 = vmax.f32 %v1505, 0.0
    %v1634 = vmax.f32 %v1506, 0.0
    %v1635 = vmax.f32 %v1507, 0.0
    %v1636 = vmax.f32 %v1508, 0.0
    %v1637 = vmax.f32 %v1509, 0.0
    %v1638 = vmax.f32 %v1510, 0.0
    %v1639 = vmax.f32 %v1511, 0.0
    %v1640 = vmax.f32 %v1512, 0.0
    %v1641 = vmax.f32 %v1513, 0.0
    %v1642 = vmax.f32 %v1514, 0.0
    %v1643 = vmax.f32 %v1515, 0.0
    %v1644 = vmax.f32 %v1516, 0.0
    %v1645 = vmax.f32 %v1517, 0.0
    %v1646 = vmax.f32 %v1518, 0.0
    %v1647 = vmax.f32 %v1519, 0.0
    %v1648 = vmax.f32 %v1520, 0.0
    %v1649 = vmax.f32 %v1521, 0.0
    %v1650 = vmax.f32 %v1522, 0.0
    %v1651 = vmax.f32 %v1523, 0.0
    %v1652 = vmax.f32 %v1524, 0.0
    %v1653 = vmax.f32 %v1525, 0.0
    %v1654 = vmax.f32 %v1526, 0.0
    %v1655 = vmax.f32 %v1527, 0.0
    %v1656 = vmax.f32 %v1528, 0.0
    %v1657 = vmax.f32 %v1529, 0.0
    %v1658 = vmax.f32 %v1530, 0.0
    %v1659 = vmax.f32 %v1531, 0.0
    %v1660 = vmax.f32 %v1532, 0.0
    %v1661 = vmax.f32 %v1533, 0.0
    %v1662 = vmax.f32 %v1534, 0.0
    %v1663 = vmax.f32 %v1535, 0.0
    %v1664 = vmax.f32 %v1536, 0.0
    %v1665 = vmax.f32 %v1537, 0.0
    %v1666 = vmax.f32 %v1538, 0.0
    %v1667 = vmax.f32 %v1539, 0.0
    %v1668 = vmax.f32 %v1540, 0.0
    %v1669 = vmax.f32 %v1541, 0.0
    %v1670 = vmax.f32 %v1542, 0.0
    %v1671 = vmax.f32 %v1543, 0.0
    %v1672 = vmax.f32 %v1544, 0.0
    %v1673 = vmax.f32 %v1545, 0.0
    %v1674 = vmax.f32 %v1546, 0.0
    %v1675 = vadd.f32 %v1547, %v1548
    %1676 = vadd.xlane.f32.xlu0 %v1675
    %v1677 = vpop.xlane.xlu0 %1676
    %v1678 = vadd.f32 %v1549, %v1550
    %1679 = vadd.xlane.f32.xlu0 %v1678
    %v1680 = vpop.xlane.xlu0 %1679
    %v1681 = vadd.f32 %v1551, %v1552
    %1682 = vadd.xlane.f32.xlu0 %v1681
    %v1683 = vpop.xlane.xlu0 %1682
    %v1684 = vadd.f32 %v1553, %v1554
    %1685 = vadd.xlane.f32.xlu0 %v1684
    %v1686 = vpop.xlane.xlu0 %1685
    %v1687 = vadd.f32 %v1555, %v1556
    %1688 = vadd.xlane.f32.xlu0 %v1687
    %v1689 = vpop.xlane.xlu0 %1688
    %v1690 = vadd.f32 %v1557, %v1558
    %1691 = vadd.xlane.f32.xlu0 %v1690
    %v1692 = vpop.xlane.xlu0 %1691
    %v1693 = vadd.f32 %v1559, %v1560
    %1694 = vadd.xlane.f32.xlu0 %v1693
    %v1695 = vpop.xlane.xlu0 %1694
    %v1696 = vadd.f32 %v1561, %v1562
    %1697 = vadd.xlane.f32.xlu0 %v1696
    %v1698 = vpop.xlane.xlu0 %1697
    %v1699 = vadd.f32 %v1563, %v1564
    %1700 = vadd.xlane.f32.xlu0 %v1699
    %v1701 = vpop.xlane.xlu0 %1700
    %v1702 = vadd.f32 %v1565, %v1566
    %1703 = vadd.xlane.f32.xlu0 %v1702
    %v1704 = vpop.xlane.xlu0 %1703
    %v1705 = vadd.f32 %v1567, %v1568
    %1706 = vadd.xlane.f32.xlu0 %v1705
    %v1707 = vpop.xlane.xlu0 %1706
    %v1708 = vadd.f32 %v1569, %v1570
    %1709 = vadd.xlane.f32.xlu0 %v1708
    %v1710 = vpop.xlane.xlu0 %1709
    %v1711 = vadd.f32 %v1571, %v1572
    %1712 = vadd.xlane.f32.xlu0 %v1711
    %v1713 = vpop.xlane.xlu0 %1712
    %v1714 = vadd.f32 %v1573, %v1574
    %1715 = vadd.xlane.f32.xlu0 %v1714
    %v1716 = vpop.xlane.xlu0 %1715
    %v1717 = vadd.f32 %v1575, %v1576
    %1718 = vadd.xlane.f32.xlu0 %v1717
    %v1719 = vpop.xlane.xlu0 %1718
    %v1720 = vadd.f32 %v1577, %v1578
    %1721 = vadd.xlane.f32.xlu0 %v1720
    %v1722 = vpop.xlane.xlu0 %1721
    %v1723 = vadd.f32 %v1579, %v1580
    %1724 = vadd.xlane.f32.xlu0 %v1723
    %v1725 = vpop.xlane.xlu0 %1724
    %v1726 = vadd.f32 %v1581, %v1582
    %1727 = vadd.xlane.f32.xlu0 %v1726
    %v1728 = vpop.xlane.xlu0 %1727
    %v1729 = vadd.f32 %v1583, %v1584
    %1730 = vadd.xlane.f32.xlu0 %v1729
    %v1731 = vpop.xlane.xlu0 %1730
    %v1732 = vadd.f32 %v1585, %v1586
    %1733 = vadd.xlane.f32.xlu0 %v1732
    %v1734 = vpop.xlane.xlu0 %1733
    %v1735 = vadd.f32 %v1587, %v1588
    %1736 = vadd.xlane.f32.xlu0 %v1735
    %v1737 = vpop.xlane.xlu0 %1736
    %v1738 = vadd.f32 %v1589, %v1590
    %1739 = vadd.xlane.f32.xlu0 %v1738
    %v1740 = vpop.xlane.xlu0 %1739
    %v1741 = vadd.f32 %v1591, %v1592
    %1742 = vadd.xlane.f32.xlu0 %v1741
    %v1743 = vpop.xlane.xlu0 %1742
    %v1744 = vadd.f32 %v1593, %v1594
    %1745 = vadd.xlane.f32.xlu0 %v1744
    %v1746 = vpop.xlane.xlu0 %1745
    %v1747 = vadd.f32 %v1595, %v1596
    %1748 = vadd.xlane.f32.xlu0 %v1747
    %v1749 = vpop.xlane.xlu0 %1748
    %v1750 = vadd.f32 %v1597, %v1598
    %1751 = vadd.xlane.f32.xlu0 %v1750
    %v1752 = vpop.xlane.xlu0 %1751
    %v1753 = vadd.f32 %v1599, %v1600
    %1754 = vadd.xlane.f32.xlu0 %v1753
    %v1755 = vpop.xlane.xlu0 %1754
    %v1756 = vadd.f32 %v1601, %v1602
    %1757 = vadd.xlane.f32.xlu0 %v1756
    %v1758 = vpop.xlane.xlu0 %1757
    %v1759 = vadd.f32 %v1603, %v1604
    %1760 = vadd.xlane.f32.xlu0 %v1759
    %v1761 = vpop.xlane.xlu0 %1760
    %v1762 = vadd.f32 %v1605, %v1606
    %1763 = vadd.xlane.f32.xlu0 %v1762
    %v1764 = vpop.xlane.xlu0 %1763
    %v1765 = vadd.f32 %v1607, %v1608
    %1766 = vadd.xlane.f32.xlu0 %v1765
    %v1767 = vpop.xlane.xlu0 %1766
    %v1768 = vadd.f32 %v1609, %v1610
    %1769 = vadd.xlane.f32.xlu0 %v1768
    %v1770 = vpop.xlane.xlu0 %1769
    %v1771 = vadd.f32 %v1611, %v1612
    %1772 = vadd.xlane.f32.xlu0 %v1771
    %v1773 = vpop.xlane.xlu0 %1772
    %v1774 = vadd.f32 %v1613, %v1614
    %1775 = vadd.xlane.f32.xlu0 %v1774
    %v1776 = vpop.xlane.xlu0 %1775
    %v1777 = vadd.f32 %v1615, %v1616
    %1778 = vadd.xlane.f32.xlu0 %v1777
    %v1779 = vpop.xlane.xlu0 %1778
    %v1780 = vadd.f32 %v1617, %v1618
    %1781 = vadd.xlane.f32.xlu0 %v1780
    %v1782 = vpop.xlane.xlu0 %1781
    %v1783 = vadd.f32 %v1619, %v1620
    %1784 = vadd.xlane.f32.xlu0 %v1783
    %v1785 = vpop.xlane.xlu0 %1784
    %v1786 = vadd.f32 %v1621, %v1622
    %1787 = vadd.xlane.f32.xlu0 %v1786
    %v1788 = vpop.xlane.xlu0 %1787
    %v1789 = vadd.f32 %v1623, %v1624
    %1790 = vadd.xlane.f32.xlu0 %v1789
    %v1791 = vpop.xlane.xlu0 %1790
    %v1792 = vadd.f32 %v1625, %v1626
    %1793 = vadd.xlane.f32.xlu0 %v1792
    %v1794 = vpop.xlane.xlu0 %1793
    %v1795 = vadd.f32 %v1627, %v1628
    %1796 = vadd.xlane.f32.xlu0 %v1795
    %v1797 = vpop.xlane.xlu0 %1796
    %v1798 = vadd.f32 %v1629, %v1630
    %1799 = vadd.xlane.f32.xlu0 %v1798
    %v1800 = vpop.xlane.xlu0 %1799
    %v1801 = vadd.f32 %v1631, %v1632
    %1802 = vadd.xlane.f32.xlu0 %v1801
    %v1803 = vpop.xlane.xlu0 %1802
    %v1804 = vadd.f32 %v1633, %v1634
    %1805 = vadd.xlane.f32.xlu0 %v1804
    %v1806 = vpop.xlane.xlu0 %1805
    %v1807 = vadd.f32 %v1635, %v1636
    %1808 = vadd.xlane.f32.xlu0 %v1807
    %v1809 = vpop.xlane.xlu0 %1808
    %v1810 = vadd.f32 %v1637, %v1638
    %1811 = vadd.xlane.f32.xlu0 %v1810
    %v1812 = vpop.xlane.xlu0 %1811
    %v1813 = vadd.f32 %v1639, %v1640
    %1814 = vadd.xlane.f32.xlu0 %v1813
    %v1815 = vpop.xlane.xlu0 %1814
    %v1816 = vadd.f32 %v1641, %v1642
    %1817 = vadd.xlane.f32.xlu0 %v1816
    %v1818 = vpop.xlane.xlu0 %1817
    %v1819 = vadd.f32 %v1643, %v1644
    %1820 = vadd.xlane.f32.xlu0 %v1819
    %v1821 = vpop.xlane.xlu0 %1820
    %v1822 = vadd.f32 %v1645, %v1646
    %1823 = vadd.xlane.f32.xlu0 %v1822
    %v1824 = vpop.xlane.xlu0 %1823
    %v1825 = vadd.f32 %v1647, %v1648
    %1826 = vadd.xlane.f32.xlu0 %v1825
    %v1827 = vpop.xlane.xlu0 %1826
    %v1828 = vadd.f32 %v1649, %v1650
    %1829 = vadd.xlane.f32.xlu0 %v1828
    %v1830 = vpop.xlane.xlu0 %1829
    %v1831 = vadd.f32 %v1651, %v1652
    %1832 = vadd.xlane.f32.xlu0 %v1831
    %v1833 = vpop.xlane.xlu0 %1832
    %v1834 = vadd.f32 %v1653, %v1654
    %1835 = vadd.xlane.f32.xlu0 %v1834
    %v1836 = vpop.xlane.xlu0 %1835
    %v1837 = vadd.f32 %v1655, %v1656
    %1838 = vadd.xlane.f32.xlu0 %v1837
    %v1839 = vpop.xlane.xlu0 %1838
    %v1840 = vadd.f32 %v1657, %v1658
    %1841 = vadd.xlane.f32.xlu0 %v1840
    %v1842 = vpop.xlane.xlu0 %1841
    %v1843 = vadd.f32 %v1659, %v1660
    %1844 = vadd.xlane.f32.xlu0 %v1843
    %v1845 = vpop.xlane.xlu0 %1844
    %v1846 = vadd.f32 %v1661, %v1662
    %1847 = vadd.xlane.f32.xlu0 %v1846
    %v1848 = vpop.xlane.xlu0 %1847
    %v1849 = vadd.f32 %v1663, %v1664
    %1850 = vadd.xlane.f32.xlu0 %v1849
    %v1851 = vpop.xlane.xlu0 %1850
    %v1852 = vadd.f32 %v1665, %v1666
    %1853 = vadd.xlane.f32.xlu0 %v1852
    %v1854 = vpop.xlane.xlu0 %1853
    %v1855 = vadd.f32 %v1667, %v1668
    %1856 = vadd.xlane.f32.xlu0 %v1855
    %v1857 = vpop.xlane.xlu0 %1856
    %v1858 = vadd.f32 %v1669, %v1670
    %1859 = vadd.xlane.f32.xlu0 %v1858
    %v1860 = vpop.xlane.xlu0 %1859
    %v1861 = vadd.f32 %v1671, %v1672
    %1862 = vadd.xlane.f32.xlu0 %v1861
    %v1863 = vpop.xlane.xlu0 %1862
    %v1864 = vadd.f32 %v1673, %v1674
    %1865 = vadd.xlane.f32.xlu0 %v1864
    %v1866 = vpop.xlane.xlu0 %1865
    %v1867 = vrcp.pop 256.0
    %v1868 = vmul.f32 %v1677, %v1867
    %v1869 = vmul.f32 %v1680, %v1867
    %v1870 = vmul.f32 %v1683, %v1867
    %v1871 = vmul.f32 %v1686, %v1867
    %v1872 = vmul.f32 %v1689, %v1867
    %v1873 = vmul.f32 %v1692, %v1867
    %v1874 = vmul.f32 %v1695, %v1867
    %v1875 = vmul.f32 %v1698, %v1867
    %v1876 = vmul.f32 %v1701, %v1867
    %v1877 = vmul.f32 %v1704, %v1867
    %v1878 = vmul.f32 %v1707, %v1867
    %v1879 = vmul.f32 %v1710, %v1867
    %v1880 = vmul.f32 %v1713, %v1867
    %v1881 = vmul.f32 %v1716, %v1867
    %v1882 = vmul.f32 %v1719, %v1867
    %v1883 = vmul.f32 %v1722, %v1867
    %v1884 = vmul.f32 %v1725, %v1867
    %v1885 = vmul.f32 %v1728, %v1867
    %v1886 = vmul.f32 %v1731, %v1867
    %v1887 = vmul.f32 %v1734, %v1867
    %v1888 = vmul.f32 %v1737, %v1867
    %v1889 = vmul.f32 %v1740, %v1867
    %v1890 = vmul.f32 %v1743, %v1867
    %v1891 = vmul.f32 %v1746, %v1867
    %v1892 = vmul.f32 %v1749, %v1867
    %v1893 = vmul.f32 %v1752, %v1867
    %v1894 = vmul.f32 %v1755, %v1867
    %v1895 = vmul.f32 %v1758, %v1867
    %v1896 = vmul.f32 %v1761, %v1867
    %v1897 = vmul.f32 %v1764, %v1867
    %v1898 = vmul.f32 %v1767, %v1867
    %v1899 = vmul.f32 %v1770, %v1867
    %v1900 = vmul.f32 %v1773, %v1867
    %v1901 = vmul.f32 %v1776, %v1867
    %v1902 = vmul.f32 %v1779, %v1867
    %v1903 = vmul.f32 %v1782, %v1867
    %v1904 = vmul.f32 %v1785, %v1867
    %v1905 = vmul.f32 %v1788, %v1867
    %v1906 = vmul.f32 %v1791, %v1867
    %v1907 = vmul.f32 %v1794, %v1867
    %v1908 = vmul.f32 %v1797, %v1867
    %v1909 = vmul.f32 %v1800, %v1867
    %v1910 = vmul.f32 %v1803, %v1867
    %v1911 = vmul.f32 %v1806, %v1867
    %v1912 = vmul.f32 %v1809, %v1867
    %v1913 = vmul.f32 %v1812, %v1867
    %v1914 = vmul.f32 %v1815, %v1867
    %v1915 = vmul.f32 %v1818, %v1867
    %v1916 = vmul.f32 %v1821, %v1867
    %v1917 = vmul.f32 %v1824, %v1867
    %v1918 = vmul.f32 %v1827, %v1867
    %v1919 = vmul.f32 %v1830, %v1867
    %v1920 = vmul.f32 %v1833, %v1867
    %v1921 = vmul.f32 %v1836, %v1867
    %v1922 = vmul.f32 %v1839, %v1867
    %v1923 = vmul.f32 %v1842, %v1867
    %v1924 = vmul.f32 %v1845, %v1867
    %v1925 = vmul.f32 %v1848, %v1867
    %v1926 = vmul.f32 %v1851, %v1867
    %v1927 = vmul.f32 %v1854, %v1867
    %v1928 = vmul.f32 %v1857, %v1867
    %v1929 = vmul.f32 %v1860, %v1867
    %v1930 = vmul.f32 %v1863, %v1867
    %v1931 = vmul.f32 %v1866, %v1867
    %v1932 = vld [vmem:[%s3] sm:$0xff]
    %v1933 = vld [vmem:[%s3 + $0x8] sm:$0xff]
    %v1934 = vld [vmem:[%s3 + $0x10] sm:$0xff]
    %v1935 = vld [vmem:[%s3 + $0x18] sm:$0xff]
    %v1936 = vld [vmem:[%s3 + $0x20] sm:$0xff]
    %v1937 = vld [vmem:[%s3 + $0x28] sm:$0xff]
    %v1938 = vld [vmem:[%s3 + $0x30] sm:$0xff]
    %v1939 = vld [vmem:[%s3 + $0x38] sm:$0xff]
    %v1940 = vld [vmem:[%s3 + $0x40] sm:$0xff]
    %v1941 = vld [vmem:[%s3 + $0x48] sm:$0xff]
    %v1942 = vld [vmem:[%s3 + $0x50] sm:$0xff]
    %v1943 = vld [vmem:[%s3 + $0x58] sm:$0xff]
    %v1944 = vld [vmem:[%s3 + $0x60] sm:$0xff]
    %v1945 = vld [vmem:[%s3 + $0x68] sm:$0xff]
    %v1946 = vld [vmem:[%s3 + $0x70] sm:$0xff]
    %v1947 = vld [vmem:[%s3 + $0x78] sm:$0xff]
    %v1948 = vld [vmem:[%s3 + $0x80] sm:$0xff]
    %v1949 = vld [vmem:[%s3 + $0x88] sm:$0xff]
    %v1950 = vld [vmem:[%s3 + $0x90] sm:$0xff]
    %v1951 = vld [vmem:[%s3 + $0x98] sm:$0xff]
    %v1952 = vld [vmem:[%s3 + $0xa0] sm:$0xff]
    %v1953 = vld [vmem:[%s3 + $0xa8] sm:$0xff]
    %v1954 = vld [vmem:[%s3 + $0xb0] sm:$0xff]
    %v1955 = vld [vmem:[%s3 + $0xb8] sm:$0xff]
    %v1956 = vld [vmem:[%s3 + $0xc0] sm:$0xff]
    %v1957 = vld [vmem:[%s3 + $0xc8] sm:$0xff]
    %v1958 = vld [vmem:[%s3 + $0xd0] sm:$0xff]
    %v1959 = vld [vmem:[%s3 + $0xd8] sm:$0xff]
    %v1960 = vld [vmem:[%s3 + $0xe0] sm:$0xff]
    %v1961 = vld [vmem:[%s3 + $0xe8] sm:$0xff]
    %v1962 = vld [vmem:[%s3 + $0xf0] sm:$0xff]
    %v1963 = vld [vmem:[%s3 + $0xf8] sm:$0xff]
    %v1964 = vld [vmem:[%s4] sm:$0x1]
    %v1966 = vlaneseq
    %v1967 = vshrl.u32 %v1966, 7
    %v1968 = vsub.s32 0, %v1967
    %v1969 = vrot.slane %v1964, %v1968
    %v2035 = vlaneseq
    %v2036 = vand.u32 %v2035, 127
    %v2037 = vlaneseq
    %v2038 = vshrl.u32 %v2037, 7
    %v2039 = vsub.s32 %v2036, %v2038
    %v2040 = vrot.slane %v1868, %v2039
    %v2041 = vadd.s32 %v2036, 4294967288
    %v2042 = vlaneseq
    %v2043 = vshrl.u32 %v2042, 7
    %v2044 = vsub.s32 %v2041, %v2043
    %v2045 = vrot.slane %v1869, %v2044
    %vm2046 = vcmask 130112
    %v2047 = vsel %vm2046, %v2045, %v2040
    %v2048 = vadd.s32 %v2036, 4294967280
    %v2049 = vlaneseq
    %v2050 = vshrl.u32 %v2049, 7
    %v2051 = vsub.s32 %v2048, %v2050
    %v2052 = vrot.slane %v1870, %v2051
    %vm2053 = vcmask 195712
    %v2054 = vsel %vm2053, %v2052, %v2047
    %v2055 = vadd.s32 %v2036, 4294967272
    %v2056 = vlaneseq
    %v2057 = vshrl.u32 %v2056, 7
    %v2058 = vsub.s32 %v2055, %v2057
    %v2059 = vrot.slane %v1871, %v2058
    %vm2060 = vcmask 261312
    %v2061 = vsel %vm2060, %v2059, %v2054
    %v2062 = vadd.s32 %v2036, 4294967264
    %v2063 = vlaneseq
    %v2064 = vshrl.u32 %v2063, 7
    %v2065 = vsub.s32 %v2062, %v2064
    %v2066 = vrot.slane %v1872, %v2065
    %vm2067 = vcmask 326912
    %v2068 = vsel %vm2067, %v2066, %v2061
    %v2069 = vadd.s32 %v2036, 4294967256
    %v2070 = vlaneseq
    %v2071 = vshrl.u32 %v2070, 7
    %v2072 = vsub.s32 %v2069, %v2071
    %v2073 = vrot.slane %v1873, %v2072
    %vm2074 = vcmask 392512
    %v2075 = vsel %vm2074, %v2073, %v2068
    %v2076 = vadd.s32 %v2036, 4294967248
    %v2077 = vlaneseq
    %v2078 = vshrl.u32 %v2077, 7
    %v2079 = vsub.s32 %v2076, %v2078
    %v2080 = vrot.slane %v1874, %v2079
    %vm2081 = vcmask 458112
    %v2082 = vsel %vm2081, %v2080, %v2075
    %v2083 = vadd.s32 %v2036, 4294967240
    %v2084 = vlaneseq
    %v2085 = vshrl.u32 %v2084, 7
    %v2086 = vsub.s32 %v2083, %v2085
    %v2087 = vrot.slane %v1875, %v2086
    %vm2088 = vcmask 523712
    %v2089 = vsel %vm2088, %v2087, %v2082
    %v2090 = vadd.s32 %v2036, 4294967232
    %v2091 = vlaneseq
    %v2092 = vshrl.u32 %v2091, 7
    %v2093 = vsub.s32 %v2090, %v2092
    %v2094 = vrot.slane %v1876, %v2093
    %vm2095 = vcmask 589312
    %v2096 = vsel %vm2095, %v2094, %v2089
    %v2097 = vadd.s32 %v2036, 4294967224
    %v2098 = vlaneseq
    %v2099 = vshrl.u32 %v2098, 7
    %v2100 = vsub.s32 %v2097, %v2099
    %v2101 = vrot.slane %v1877, %v2100
    %vm2102 = vcmask 654912
    %v2103 = vsel %vm2102, %v2101, %v2096
    %v2104 = vadd.s32 %v2036, 4294967216
    %v2105 = vlaneseq
    %v2106 = vshrl.u32 %v2105, 7
    %v2107 = vsub.s32 %v2104, %v2106
    %v2108 = vrot.slane %v1878, %v2107
    %vm2109 = vcmask 720512
    %v2110 = vsel %vm2109, %v2108, %v2103
    %v2111 = vadd.s32 %v2036, 4294967208
    %v2112 = vlaneseq
    %v2113 = vshrl.u32 %v2112, 7
    %v2114 = vsub.s32 %v2111, %v2113
    %v2115 = vrot.slane %v1879, %v2114
    %vm2116 = vcmask 786112
    %v2117 = vsel %vm2116, %v2115, %v2110
    %v2118 = vadd.s32 %v2036, 4294967200
    %v2119 = vlaneseq
    %v2120 = vshrl.u32 %v2119, 7
    %v2121 = vsub.s32 %v2118, %v2120
    %v2122 = vrot.slane %v1880, %v2121
    %vm2123 = vcmask 851712
    %v2124 = vsel %vm2123, %v2122, %v2117
    %v2125 = vadd.s32 %v2036, 4294967192
    %v2126 = vlaneseq
    %v2127 = vshrl.u32 %v2126, 7
    %v2128 = vsub.s32 %v2125, %v2127
    %v2129 = vrot.slane %v1881, %v2128
    %vm2130 = vcmask 917312
    %v2131 = vsel %vm2130, %v2129, %v2124
    %v2132 = vadd.s32 %v2036, 4294967184
    %v2133 = vlaneseq
    %v2134 = vshrl.u32 %v2133, 7
    %v2135 = vsub.s32 %v2132, %v2134
    %v2136 = vrot.slane %v1882, %v2135
    %vm2137 = vcmask 982912
    %v2138 = vsel %vm2137, %v2136, %v2131
    %v2139 = vadd.s32 %v2036, 4294967176
    %v2140 = vlaneseq
    %v2141 = vshrl.u32 %v2140, 7
    %v2142 = vsub.s32 %v2139, %v2141
    %v2143 = vrot.slane %v1883, %v2142
    %vm2144 = vcmask 1048512
    %v2145 = vsel %vm2144, %v2143, %v2138
    %v2146 = vlaneseq
    %v2147 = vshrl.u32 %v2146, 7
    %v2148 = vsub.s32 %v2036, %v2147
    %v2149 = vrot.slane %v1884, %v2148
    %v2150 = vlaneseq
    %v2151 = vshrl.u32 %v2150, 7
    %v2152 = vsub.s32 %v2041, %v2151
    %v2153 = vrot.slane %v1885, %v2152
    %v2154 = vsel %vm2046, %v2153, %v2149
    %v2155 = vlaneseq
    %v2156 = vshrl.u32 %v2155, 7
    %v2157 = vsub.s32 %v2048, %v2156
    %v2158 = vrot.slane %v1886, %v2157
    %v2159 = vsel %vm2053, %v2158, %v2154
    %v2160 = vlaneseq
    %v2161 = vshrl.u32 %v2160, 7
    %v2162 = vsub.s32 %v2055, %v2161
    %v2163 = vrot.slane %v1887, %v2162
    %v2164 = vsel %vm2060, %v2163, %v2159
    %v2165 = vlaneseq
    %v2166 = vshrl.u32 %v2165, 7
    %v2167 = vsub.s32 %v2062, %v2166
    %v2168 = vrot.slane %v1888, %v2167
    %v2169 = vsel %vm2067, %v2168, %v2164
    %v2170 = vlaneseq
    %v2171 = vshrl.u32 %v2170, 7
    %v2172 = vsub.s32 %v2069, %v2171
    %v2173 = vrot.slane %v1889, %v2172
    %v2174 = vsel %vm2074, %v2173, %v2169
    %v2175 = vlaneseq
    %v2176 = vshrl.u32 %v2175, 7
    %v2177 = vsub.s32 %v2076, %v2176
    %v2178 = vrot.slane %v1890, %v2177
    %v2179 = vsel %vm2081, %v2178, %v2174
    %v2180 = vlaneseq
    %v2181 = vshrl.u32 %v2180, 7
    %v2182 = vsub.s32 %v2083, %v2181
    %v2183 = vrot.slane %v1891, %v2182
    %v2184 = vsel %vm2088, %v2183, %v2179
    %v2185 = vlaneseq
    %v2186 = vshrl.u32 %v2185, 7
    %v2187 = vsub.s32 %v2090, %v2186
    %v2188 = vrot.slane %v1892, %v2187
    %v2189 = vsel %vm2095, %v2188, %v2184
    %v2190 = vlaneseq
    %v2191 = vshrl.u32 %v2190, 7
    %v2192 = vsub.s32 %v2097, %v2191
    %v2193 = vrot.slane %v1893, %v2192
    %v2194 = vsel %vm2102, %v2193, %v2189
    %v2195 = vlaneseq
    %v2196 = vshrl.u32 %v2195, 7
    %v2197 = vsub.s32 %v2104, %v2196
    %v2198 = vrot.slane %v1894, %v2197
    %v2199 = vsel %vm2109, %v2198, %v2194
    %v2200 = vlaneseq
    %v2201 = vshrl.u32 %v2200, 7
    %v2202 = vsub.s32 %v2111, %v2201
    %v2203 = vrot.slane %v1895, %v2202
    %v2204 = vsel %vm2116, %v2203, %v2199
    %v2205 = vlaneseq
    %v2206 = vshrl.u32 %v2205, 7
    %v2207 = vsub.s32 %v2118, %v2206
    %v2208 = vrot.slane %v1896, %v2207
    %v2209 = vsel %vm2123, %v2208, %v2204
    %v2210 = vlaneseq
    %v2211 = vshrl.u32 %v2210, 7
    %v2212 = vsub.s32 %v2125, %v2211
    %v2213 = vrot.slane %v1897, %v2212
    %v2214 = vsel %vm2130, %v2213, %v2209
    %v2215 = vlaneseq
    %v2216 = vshrl.u32 %v2215, 7
    %v2217 = vsub.s32 %v2132, %v2216
    %v2218 = vrot.slane %v1898, %v2217
    %v2219 = vsel %vm2137, %v2218, %v2214
    %v2220 = vlaneseq
    %v2221 = vshrl.u32 %v2220, 7
    %v2222 = vsub.s32 %v2139, %v2221
    %v2223 = vrot.slane %v1899, %v2222
    %v2224 = vsel %vm2144, %v2223, %v2219
    %v2225 = vlaneseq
    %v2226 = vshrl.u32 %v2225, 7
    %v2227 = vsub.s32 %v2036, %v2226
    %v2228 = vrot.slane %v1900, %v2227
    %v2229 = vlaneseq
    %v2230 = vshrl.u32 %v2229, 7
    %v2231 = vsub.s32 %v2041, %v2230
    %v2232 = vrot.slane %v1901, %v2231
    %v2233 = vsel %vm2046, %v2232, %v2228
    %v2234 = vlaneseq
    %v2235 = vshrl.u32 %v2234, 7
    %v2236 = vsub.s32 %v2048, %v2235
    %v2237 = vrot.slane %v1902, %v2236
    %v2238 = vsel %vm2053, %v2237, %v2233
    %v2239 = vlaneseq
    %v2240 = vshrl.u32 %v2239, 7
    %v2241 = vsub.s32 %v2055, %v2240
    %v2242 = vrot.slane %v1903, %v2241
    %v2243 = vsel %vm2060, %v2242, %v2238
    %v2244 = vlaneseq
    %v2245 = vshrl.u32 %v2244, 7
    %v2246 = vsub.s32 %v2062, %v2245
    %v2247 = vrot.slane %v1904, %v2246
    %v2248 = vsel %vm2067, %v2247, %v2243
    %v2249 = vlaneseq
    %v2250 = vshrl.u32 %v2249, 7
    %v2251 = vsub.s32 %v2069, %v2250
    %v2252 = vrot.slane %v1905, %v2251
    %v2253 = vsel %vm2074, %v2252, %v2248
    %v2254 = vlaneseq
    %v2255 = vshrl.u32 %v2254, 7
    %v2256 = vsub.s32 %v2076, %v2255
    %v2257 = vrot.slane %v1906, %v2256
    %v2258 = vsel %vm2081, %v2257, %v2253
    %v2259 = vlaneseq
    %v2260 = vshrl.u32 %v2259, 7
    %v2261 = vsub.s32 %v2083, %v2260
    %v2262 = vrot.slane %v1907, %v2261
    %v2263 = vsel %vm2088, %v2262, %v2258
    %v2264 = vlaneseq
    %v2265 = vshrl.u32 %v2264, 7
    %v2266 = vsub.s32 %v2090, %v2265
    %v2267 = vrot.slane %v1908, %v2266
    %v2268 = vsel %vm2095, %v2267, %v2263
    %v2269 = vlaneseq
    %v2270 = vshrl.u32 %v2269, 7
    %v2271 = vsub.s32 %v2097, %v2270
    %v2272 = vrot.slane %v1909, %v2271
    %v2273 = vsel %vm2102, %v2272, %v2268
    %v2274 = vlaneseq
    %v2275 = vshrl.u32 %v2274, 7
    %v2276 = vsub.s32 %v2104, %v2275
    %v2277 = vrot.slane %v1910, %v2276
    %v2278 = vsel %vm2109, %v2277, %v2273
    %v2279 = vlaneseq
    %v2280 = vshrl.u32 %v2279, 7
    %v2281 = vsub.s32 %v2111, %v2280
    %v2282 = vrot.slane %v1911, %v2281
    %v2283 = vsel %vm2116, %v2282, %v2278
    %v2284 = vlaneseq
    %v2285 = vshrl.u32 %v2284, 7
    %v2286 = vsub.s32 %v2118, %v2285
    %v2287 = vrot.slane %v1912, %v2286
    %v2288 = vsel %vm2123, %v2287, %v2283
    %v2289 = vlaneseq
    %v2290 = vshrl.u32 %v2289, 7
    %v2291 = vsub.s32 %v2125, %v2290
    %v2292 = vrot.slane %v1913, %v2291
    %v2293 = vsel %vm2130, %v2292, %v2288
    %v2294 = vlaneseq
    %v2295 = vshrl.u32 %v2294, 7
    %v2296 = vsub.s32 %v2132, %v2295
    %v2297 = vrot.slane %v1914, %v2296
    %v2298 = vsel %vm2137, %v2297, %v2293
    %v2299 = vlaneseq
    %v2300 = vshrl.u32 %v2299, 7
    %v2301 = vsub.s32 %v2139, %v2300
    %v2302 = vrot.slane %v1915, %v2301
    %v2303 = vsel %vm2144, %v2302, %v2298
    %v2304 = vlaneseq
    %v2305 = vshrl.u32 %v2304, 7
    %v2306 = vsub.s32 %v2036, %v2305
    %v2307 = vrot.slane %v1916, %v2306
    %v2308 = vlaneseq
    %v2309 = vshrl.u32 %v2308, 7
    %v2310 = vsub.s32 %v2041, %v2309
    %v2311 = vrot.slane %v1917, %v2310
    %v2312 = vsel %vm2046, %v2311, %v2307
    %v2313 = vlaneseq
    %v2314 = vshrl.u32 %v2313, 7
    %v2315 = vsub.s32 %v2048, %v2314
    %v2316 = vrot.slane %v1918, %v2315
    %v2317 = vsel %vm2053, %v2316, %v2312
    %v2318 = vlaneseq
    %v2319 = vshrl.u32 %v2318, 7
    %v2320 = vsub.s32 %v2055, %v2319
    %v2321 = vrot.slane %v1919, %v2320
    %v2322 = vsel %vm2060, %v2321, %v2317
    %v2323 = vlaneseq
    %v2324 = vshrl.u32 %v2323, 7
    %v2325 = vsub.s32 %v2062, %v2324
    %v2326 = vrot.slane %v1920, %v2325
    %v2327 = vsel %vm2067, %v2326, %v2322
    %v2328 = vlaneseq
    %v2329 = vshrl.u32 %v2328, 7
    %v2330 = vsub.s32 %v2069, %v2329
    %v2331 = vrot.slane %v1921, %v2330
    %v2332 = vsel %vm2074, %v2331, %v2327
    %v2333 = vlaneseq
    %v2334 = vshrl.u32 %v2333, 7
    %v2335 = vsub.s32 %v2076, %v2334
    %v2336 = vrot.slane %v1922, %v2335
    %v2337 = vsel %vm2081, %v2336, %v2332
    %v2338 = vlaneseq
    %v2339 = vshrl.u32 %v2338, 7
    %v2340 = vsub.s32 %v2083, %v2339
    %v2341 = vrot.slane %v1923, %v2340
    %v2342 = vsel %vm2088, %v2341, %v2337
    %v2343 = vlaneseq
    %v2344 = vshrl.u32 %v2343, 7
    %v2345 = vsub.s32 %v2090, %v2344
    %v2346 = vrot.slane %v1924, %v2345
    %v2347 = vsel %vm2095, %v2346, %v2342
    %v2348 = vlaneseq
    %v2349 = vshrl.u32 %v2348, 7
    %v2350 = vsub.s32 %v2097, %v2349
    %v2351 = vrot.slane %v1925, %v2350
    %v2352 = vsel %vm2102, %v2351, %v2347
    %v2353 = vlaneseq
    %v2354 = vshrl.u32 %v2353, 7
    %v2355 = vsub.s32 %v2104, %v2354
    %v2356 = vrot.slane %v1926, %v2355
    %v2357 = vsel %vm2109, %v2356, %v2352
    %v2358 = vlaneseq
    %v2359 = vshrl.u32 %v2358, 7
    %v2360 = vsub.s32 %v2111, %v2359
    %v2361 = vrot.slane %v1927, %v2360
    %v2362 = vsel %vm2116, %v2361, %v2357
    %v2363 = vlaneseq
    %v2364 = vshrl.u32 %v2363, 7
    %v2365 = vsub.s32 %v2118, %v2364
    %v2366 = vrot.slane %v1928, %v2365
    %v2367 = vsel %vm2123, %v2366, %v2362
    %v2368 = vlaneseq
    %v2369 = vshrl.u32 %v2368, 7
    %v2370 = vsub.s32 %v2125, %v2369
    %v2371 = vrot.slane %v1929, %v2370
    %v2372 = vsel %vm2130, %v2371, %v2367
    %v2373 = vlaneseq
    %v2374 = vshrl.u32 %v2373, 7
    %v2375 = vsub.s32 %v2132, %v2374
    %v2376 = vrot.slane %v1930, %v2375
    %v2377 = vsel %vm2137, %v2376, %v2372
    %v2378 = vlaneseq
    %v2379 = vshrl.u32 %v2378, 7
    %v2380 = vsub.s32 %v2139, %v2379
    %v2381 = vrot.slane %v1931, %v2380
    %v2382 = vsel %vm2144, %v2381, %v2377
    %vm2383 = vcmask 1041409
    %v2384 = vsel %vm2383, %v2303, %v2145
    %v2385 = vsel %vm2383, %v2382, %v2224
    %2388 = vmatprep.subr.mxu0 0.0
    %2389 = vmatpush1.msra.mxu0 %v1932
    %2390 = vmatprep.subr.mxu0 0.0
    %2391 = vmatpush1.msra.mxu0 %v1933
    %2392 = vmatprep.subr.mxu0 0.0
    %2393 = vmatpush1.msra.mxu0 %v1934
    %2394 = vmatprep.subr.mxu0 0.0
    %2395 = vmatpush1.msra.mxu0 %v1935
    %2396 = vmatprep.subr.mxu0 0.0
    %2397 = vmatpush1.msra.mxu0 %v1936
    %2398 = vmatprep.subr.mxu0 0.0
    %2399 = vmatpush1.msra.mxu0 %v1937
    %2400 = vmatprep.subr.mxu0 0.0
    %2401 = vmatpush1.msra.mxu0 %v1938
    %2402 = vmatprep.subr.mxu0 0.0
    %2403 = vmatpush1.msra.mxu0 %v1939
    %2404 = vmatprep.subr.mxu0 0.0
    %2405 = vmatpush1.msra.mxu0 %v1940
    %2406 = vmatprep.subr.mxu0 0.0
    %2407 = vmatpush1.msra.mxu0 %v1941
    %2408 = vmatprep.subr.mxu0 0.0
    %2409 = vmatpush1.msra.mxu0 %v1942
    %2410 = vmatprep.subr.mxu0 0.0
    %2411 = vmatpush1.msra.mxu0 %v1943
    %2412 = vmatprep.subr.mxu0 0.0
    %2413 = vmatpush1.msra.mxu0 %v1944
    %2414 = vmatprep.subr.mxu0 0.0
    %2415 = vmatpush1.msra.mxu0 %v1945
    %2416 = vmatprep.subr.mxu0 0.0
    %2417 = vmatpush1.msra.mxu0 %v1946
    %2418 = vmatprep.subr.mxu0 0.0
    %2419 = vmatpush1.msra.mxu0 %v1947
    %2420 = vmatprep.subr.mxu0 0.0
    %2421 = vmatpush1.msra.mxu0 %v1948
    %2422 = vmatprep.subr.mxu0 0.0
    %2423 = vmatpush1.msra.mxu0 %v1949
    %2424 = vmatprep.subr.mxu0 0.0
    %2425 = vmatpush1.msra.mxu0 %v1950
    %2426 = vmatprep.subr.mxu0 0.0
    %2427 = vmatpush1.msra.mxu0 %v1951
    %2428 = vmatprep.subr.mxu0 0.0
    %2429 = vmatpush1.msra.mxu0 %v1952
    %2430 = vmatprep.subr.mxu0 0.0
    %2431 = vmatpush1.msra.mxu0 %v1953
    %2432 = vmatprep.subr.mxu0 0.0
    %2433 = vmatpush1.msra.mxu0 %v1954
    %2434 = vmatprep.subr.mxu0 0.0
    %2435 = vmatpush1.msra.mxu0 %v1955
    %2436 = vmatprep.subr.mxu0 0.0
    %2437 = vmatpush1.msra.mxu0 %v1956
    %2438 = vmatprep.subr.mxu0 0.0
    %2439 = vmatpush1.msra.mxu0 %v1957
    %2440 = vmatprep.subr.mxu0 0.0
    %2441 = vmatpush1.msra.mxu0 %v1958
    %2442 = vmatprep.subr.mxu0 0.0
    %2443 = vmatpush1.msra.mxu0 %v1959
    %2444 = vmatprep.subr.mxu0 0.0
    %2445 = vmatpush1.msra.mxu0 %v1960
    %2446 = vmatprep.subr.mxu0 0.0
    %2447 = vmatpush1.msra.mxu0 %v1961
    %2448 = vmatprep.subr.mxu0 0.0
    %2449 = vmatpush1.msra.mxu0 %v1962
    %2450 = vmatprep.subr.mxu0 0.0
    %2451 = vmatpush1.msra.mxu0 %v1963
    %2452 = vmatprep.mubr.f32.mxu0 %v2385
    %2453 = vmatmul.mubr.f32.gmra.mrb[0].mxu0 %v2384
    %v2454 = vpop.f32.mrb[0].mxu0
    %v2455 = vadd.f32 %v1969, %v2454
    %v2456 = vpop.f32.mrb[0].mxu0
    %2457 = vdwg.mxu0
    %v2458 = vld [vmem:[%s5] sm:$0xff]
    %v2459 = vld [vmem:[%s5 + $0x8] sm:$0xff]
    %v2460 = vld [vmem:[%s5 + $0x10] sm:$0xff]
    %v2461 = vld [vmem:[%s5 + $0x18] sm:$0xff]
    %v2462 = vld [vmem:[%s5 + $0x20] sm:$0xff]
    %v2463 = vld [vmem:[%s5 + $0x28] sm:$0xff]
    %v2464 = vld [vmem:[%s5 + $0x30] sm:$0xff]
    %v2465 = vld [vmem:[%s5 + $0x38] sm:$0xff]
    %v2466 = vld [vmem:[%s5 + $0x40] sm:$0xff]
    %v2467 = vld [vmem:[%s5 + $0x48] sm:$0xff]
    %v2468 = vld [vmem:[%s5 + $0x50] sm:$0xff]
    %v2469 = vld [vmem:[%s5 + $0x58] sm:$0xff]
    %v2470 = vld [vmem:[%s5 + $0x60] sm:$0xff]
    %v2471 = vld [vmem:[%s5 + $0x68] sm:$0xff]
    %v2472 = vld [vmem:[%s5 + $0x70] sm:$0xff]
    %v2473 = vld [vmem:[%s5 + $0x78] sm:$0xff]
    %v2474 = vld [vmem:[%s6] sm:$0x1]
    %v2476 = vlaneseq
    %v2477 = vshrl.u32 %v2476, 7
    %v2478 = vsub.s32 0, %v2477
    %v2479 = vrot.slane %v2474, %v2478
    %2481 = vmatprep.subr.mxu0 0.0
    %2482 = vmatpush1.msra.mxu0 %v2458
    %2483 = vmatprep.subr.mxu0 0.0
    %2484 = vmatpush1.msra.mxu0 %v2459
    %2485 = vmatprep.subr.mxu0 0.0
    %2486 = vmatpush1.msra.mxu0 %v2460
    %2487 = vmatprep.subr.mxu0 0.0
    %2488 = vmatpush1.msra.mxu0 %v2461
    %2489 = vmatprep.subr.mxu0 0.0
    %2490 = vmatpush1.msra.mxu0 %v2462
    %2491 = vmatprep.subr.mxu0 0.0
    %2492 = vmatpush1.msra.mxu0 %v2463
    %2493 = vmatprep.subr.mxu0 0.0
    %2494 = vmatpush1.msra.mxu0 %v2464
    %2495 = vmatprep.subr.mxu0 0.0
    %2496 = vmatpush1.msra.mxu0 %v2465
    %2497 = vmatprep.subr.mxu0 0.0
    %2498 = vmatpush1.msra.mxu0 %v2466
    %2499 = vmatprep.subr.mxu0 0.0
    %2500 = vmatpush1.msra.mxu0 %v2467
    %2501 = vmatprep.subr.mxu0 0.0
    %2502 = vmatpush1.msra.mxu0 %v2468
    %2503 = vmatprep.subr.mxu0 0.0
    %2504 = vmatpush1.msra.mxu0 %v2469
    %2505 = vmatprep.subr.mxu0 0.0
    %2506 = vmatpush1.msra.mxu0 %v2470
    %2507 = vmatprep.subr.mxu0 0.0
    %2508 = vmatpush1.msra.mxu0 %v2471
    %2509 = vmatprep.subr.mxu0 0.0
    %2510 = vmatpush1.msra.mxu0 %v2472
    %2511 = vmatprep.subr.mxu0 0.0
    %2512 = vmatpush1.msra.mxu0 %v2473
    %2513 = vmatprep.subr.mxu0 0.0
    %2514 = vmatpush1.msra.mxu0 0.0
    %2515 = vmatprep.subr.mxu0 0.0
    %2516 = vmatpush1.msra.mxu0 0.0
    %2517 = vmatprep.subr.mxu0 0.0
    %2518 = vmatpush1.msra.mxu0 0.0
    %2519 = vmatprep.subr.mxu0 0.0
    %2520 = vmatpush1.msra.mxu0 0.0
    %2521 = vmatprep.subr.mxu0 0.0
    %2522 = vmatpush1.msra.mxu0 0.0
    %2523 = vmatprep.subr.mxu0 0.0
    %2524 = vmatpush1.msra.mxu0 0.0
    %2525 = vmatprep.subr.mxu0 0.0
    %2526 = vmatpush1.msra.mxu0 0.0
    %2527 = vmatprep.subr.mxu0 0.0
    %2528 = vmatpush1.msra.mxu0 0.0
    %2529 = vmatprep.subr.mxu0 0.0
    %2530 = vmatpush1.msra.mxu0 0.0
    %2531 = vmatprep.subr.mxu0 0.0
    %2532 = vmatpush1.msra.mxu0 0.0
    %2533 = vmatprep.subr.mxu0 0.0
    %2534 = vmatpush1.msra.mxu0 0.0
    %2535 = vmatprep.subr.mxu0 0.0
    %2536 = vmatpush1.msra.mxu0 0.0
    %2537 = vmatprep.subr.mxu0 0.0
    %2538 = vmatpush1.msra.mxu0 0.0
    %2539 = vmatprep.subr.mxu0 0.0
    %2540 = vmatpush1.msra.mxu0 0.0
    %2541 = vmatprep.subr.mxu0 0.0
    %2542 = vmatpush1.msra.mxu0 0.0
    %2543 = vmatprep.subr.mxu0 0.0
    %2544 = vmatpush1.msra.mxu0 0.0
    %2545 = vmatprep.mubr.f32.mxu0 0.0
    %2546 = vmatmul.mubr.f32.gmra.mrb[0].mxu0 %v2455
    %v2547 = vpop.f32.mrb[0].mxu0
    %v2548 = vadd.f32 %v2479, %v2547
    %v2549 = vpop.f32.mrb[0].mxu0
    %2550 = vdwg.mxu0
    %vm2551 = vcmask 17408
    %v2552 = vsel %vm2551, %v2548, -inf
    %2553 = vmax.xlane.f32.xlu0 %v2552
    %v2554 = vpop.xlane.xlu0 %2553
    %v2555 = vsub.f32 %v2548, %v2554
    %v2556 = vmul.f32 %v2555, 1.442695
    %v2557 = vpow.pop %v2556
    %v2558 = vsel %vm2551, %v2557, 0.0
    %2559 = vadd.xlane.f32.xlu0 %v2558
    %v2560 = vpop.xlane.xlu0 %2559
    %v2561 = vrcp.pop %v2560
    %v2562 = vmul.f32 %v2557, %v2561
    %2563 = vst.msk [vmem:[#allocation2] sm:$0x3] %vm2551, %v2562
    // Predicated region
    $region30: #{model_out_forward.1} parent=1 // pred_check
      _
    $region31: #{model_out_forward.1} parent=1 // pred_check_branch
      %2565 = sbr.rel (0) target = $region33
    $region32: #{model_out_forward.1} parent=1 // pred_region
      %s2567 = ssub.s32 32, 32
      %2568 = vsyncadd [#allocation3], %s2567
      %s2570 = sshll.u32 [#allocation2], 4
      %s2571 = int_to_ptr.vmem [resolvable:$true] %s2570
      %2573 = dma.vmem_to_hbm [thread:$0]  %s2571, 32, %s7, [#allocation3]
    $region33: #{model_out_forward.1} parent=1 // pred_fallthru
      _
    // Predicated region
    $region34: #{model_out_forward.1} parent=1 // pred_check
      _
    $region35: #{model_out_forward.1} parent=1 // pred_check_branch
      %2575 = sbr.rel (0) target = $region37
    $region36: #{model_out_forward.1} parent=1 // pred_region
      %2576 = dma.done [#allocation3], 32
    $region37: #{model_out_forward.1} parent=1 // pred_fallthru
      _
    %2577 = vsyncpa [#allocation3], 1

</llo_original>
